<compile_context>
chip_gen: v7x
topology: tpu7x:2x2x1
jax: 0.10.0
libtpu: 0.0.40
codegen_flags: <defaults>
</compile_context>

<pallas_src>
import jax
import jax.numpy as jnp
from jax.experimental import pallas as pl
from jax.experimental.pallas import tpu as pltpu


def _ceil_to(x: int, m: int) -> int:
    return ((x + m - 1) // m) * m


def mlp_policy_kernel(obs_ref, eps_ref,                 # [TB, ob_dim], [TB, ac_dim] f32
                      w1_ref, b1_ref,                   # [ob_dim, H],  [1, H]
                      w2_ref, b2_ref,                   # [H, H],       [1, H]
                      w3_ref, b3_ref,                   # [H, ac_dim],  [1, ac_dim]
                      exp_std_ref,                      # [1, ac_dim]   (= exp(_std), precomputed)
                      act_ref, mean_ref):               # [TB, ac_dim] f32 outputs
    obs = obs_ref[...]
    h1 = jnp.tanh(jnp.dot(obs, w1_ref[...],
                          preferred_element_type=jnp.float32) + b1_ref[...])
    h2 = jnp.tanh(jnp.dot(h1, w2_ref[...],
                          preferred_element_type=jnp.float32) + b2_ref[...])
    mean = jnp.dot(h2, w3_ref[...],
                   preferred_element_type=jnp.float32) + b3_ref[...]

    mean_ref[...] = mean                                   # deterministic-branch output
    act_ref[...] = mean + exp_std_ref[...] * eps_ref[...]  # Normal(mean, std).rsample()


def prepare_params(params):
    """One-time wrapper-side prep: precompute exp(std) so the kernel epilogue
    has no per-tile transcendental. Weights are stored [in, out] so that
    y = x @ W + b matches torch.nn.Linear."""
    p = dict(params)
    p["exp_std"] = jnp.exp(params["std"])
    return p


def _pick_block_b(B: int, requested: int) -> int:
    bb = max(8, _ceil_to(min(requested, B), 8))
    # Keep >= 2 grid steps when there is enough work: v7x has 2 TensorCores and
    # the "parallel" batch axis only shards if the grid has multiple steps.
    if B >= 16 and pl.cdiv(B, bb) < 2:
        bb = max(8, _ceil_to(pl.cdiv(B, 2), 8))
    return bb


def mlp_policy_forward(obs, params, eps, *, block_b=1024):
    """Stochastic MLPPolicy forward. Returns (action, mean):
         action = mean + exp(_std) * eps    (== Normal(mean, std).rsample())
         mean   = mean_net(obs)             (deterministic branch)
    obs: [B, ob_dim] (or [ob_dim]); eps: [B, ac_dim] standard-normal noise
    (caller advances the PRNG key per forward call); params: prepare_params output.
    """
    p = params
    if obs.ndim == 1:
        obs = obs[None, :]
    if eps.ndim == 1:
        eps = eps[None, :]
    obs = obs.astype(jnp.float32)
    eps = eps.astype(jnp.float32)

    B, ob_dim = obs.shape
    ac_dim = p["w3"].shape[1]

    bb = _pick_block_b(B, block_b)
    grid = (pl.cdiv(B, bb),)

    row = lambda i: (i, 0)        # streamed + double-buffered per batch tile
    resident = lambda i: (0, 0)   # same block every step -> stays VMEM-resident

    act, mean = pl.pallas_call(
        mlp_policy_kernel,
        out_shape=(jax.ShapeDtypeStruct((B, ac_dim), jnp.float32),
                   jax.ShapeDtypeStruct((B, ac_dim), jnp.float32)),
        grid=grid,
        in_specs=[
            pl.BlockSpec((bb, ob_dim), row),          # obs (unpadded: last dim == full dim)
            pl.BlockSpec((bb, ac_dim), row),          # eps
            pl.BlockSpec(p["w1"].shape, resident),
            pl.BlockSpec(p["b1"].shape, resident),
            pl.BlockSpec(p["w2"].shape, resident),
            pl.BlockSpec(p["b2"].shape, resident),
            pl.BlockSpec(p["w3"].shape, resident),
            pl.BlockSpec(p["b3"].shape, resident),
            pl.BlockSpec(p["exp_std"].shape, resident),
        ],
        out_specs=(
            pl.BlockSpec((bb, ac_dim), row),          # action
            pl.BlockSpec((bb, ac_dim), row),          # mean
        ),
        compiler_params=pltpu.CompilerParams(
            dimension_semantics=("parallel",),
        ),
    )(obs, eps, p["w1"], p["b1"], p["w2"], p["b2"], p["w3"], p["b3"], p["exp_std"])

    return act, mean


def mlp_policy_mean_ref(obs, params):
    """Plain-JAX f32 reference mirroring mean_net(obs) in the PyTorch module."""
    h1 = jnp.tanh(obs @ params["w1"] + params["b1"])
    h2 = jnp.tanh(h1 @ params["w2"] + params["b2"])
    return h2 @ params["w3"] + params["b3"]


def init_params(key, ob_dim, hidden, ac_dim):
    ks = jax.random.split(key, 6)
    scale = 0.1
    return {
        "w1": scale * jax.random.normal(ks[0], (ob_dim, hidden), jnp.float32),
        "b1": scale * jax.random.normal(ks[1], (1, hidden), jnp.float32),
        "w2": scale * jax.random.normal(ks[2], (hidden, hidden), jnp.float32),
        "b2": scale * jax.random.normal(ks[3], (1, hidden), jnp.float32),
        "w3": scale * jax.random.normal(ks[4], (hidden, ac_dim), jnp.float32),
        "b3": scale * jax.random.normal(ks[5], (1, ac_dim), jnp.float32),
        # nn.Parameter(torch.ones(ac_dim) * 0.1); forward applies .exp(), so the
        # effective initial std is exp(0.1) ~= 1.105 -- exactly as in the source.
        "std": jnp.full((1, ac_dim), 0.1, jnp.float32),
    }


if __name__ == "__main__":
    B, ob_dim, hidden, ac_dim = 512, 16, 32, 8   # 512 rows -> grid of 2 tiles (256 rows each)

    key = jax.random.PRNGKey(0)
    k_obs, k_params, k_noise = jax.random.split(key, 3)
    obs = jax.random.normal(k_obs, (B, ob_dim), jnp.float32)
    params = init_params(k_params, ob_dim, hidden, ac_dim)
    prepped = prepare_params(params)             # one-time exp(std) precompute

    # eps ~ N(0,1): reparameterized noise for Normal(mean, std).rsample().
    eps = jax.random.normal(k_noise, (B, ac_dim), jnp.float32)

    action, mean = mlp_policy_forward(obs, prepped, eps)
    action, mean = jax.block_until_ready((action, mean))

    assert action.shape == (B, ac_dim) and mean.shape == (B, ac_dim)

    # Deterministic part: mean must match the f32 reference.
    ref_mean = mlp_policy_mean_ref(obs, params)
    mean_err = float(jnp.max(jnp.abs(mean - ref_mean)))
    assert jnp.allclose(mean, ref_mean, atol=2e-2, rtol=2e-2), mean_err

    # Stochastic part: action must equal mean + exp(std) * eps exactly (same eps).
    ref_action = ref_mean + jnp.exp(params["std"]) * eps
    act_err = float(jnp.max(jnp.abs(action - ref_action)))
    assert jnp.allclose(action, ref_action, atol=2e-2, rtol=2e-2), act_err
    assert bool(jnp.all(jnp.isfinite(action)))

    # TODO(synk): the discrete branch returns a torch.distributions.Categorical
    # object; only its logits MLP would be kernel-able, so it is not modeled here.
    print("KERNEL_OK")
</pallas_src>

<mosaic_0001>
module attributes {stable_mosaic.version = 11 : i64} {
  func.func @mlp_policy_kernel(%arg0: i32, %arg1: memref<256x16xf32, #tpu.memory_space<vmem>>, %arg2: memref<256x8xf32, #tpu.memory_space<vmem>>, %arg3: memref<16x32xf32, #tpu.memory_space<vmem>>, %arg4: memref<1x32xf32, #tpu.memory_space<vmem>>, %arg5: memref<32x32xf32, #tpu.memory_space<vmem>>, %arg6: memref<1x32xf32, #tpu.memory_space<vmem>>, %arg7: memref<32x8xf32, #tpu.memory_space<vmem>>, %arg8: memref<1x8xf32, #tpu.memory_space<vmem>>, %arg9: memref<1x8xf32, #tpu.memory_space<vmem>>, %arg10: memref<256x8xf32, #tpu.memory_space<vmem>>, %arg11: memref<256x8xf32, #tpu.memory_space<vmem>>) attributes {dimension_semantics = [#tpu.dimension_semantics<parallel>], iteration_bounds = array<i64: 2>, scalar_prefetch = 0 : i64, scratch_operands = 0 : i64, tpu.core_type = #tpu.core_type<tc>, window_params = [{transform_indices = @transform_0, window_bounds = array<i64: 256, 16>}, {transform_indices = @transform_1, window_bounds = array<i64: 256, 8>}, {pipeline_mode = #tpu.pipeline_mode<synchronous>, transform_indices = @transform_2, window_bounds = array<i64: 16, 32>}, {pipeline_mode = #tpu.pipeline_mode<synchronous>, transform_indices = @transform_3, window_bounds = array<i64: 1, 32>}, {pipeline_mode = #tpu.pipeline_mode<synchronous>, transform_indices = @transform_4, window_bounds = array<i64: 32, 32>}, {pipeline_mode = #tpu.pipeline_mode<synchronous>, transform_indices = @transform_5, window_bounds = array<i64: 1, 32>}, {pipeline_mode = #tpu.pipeline_mode<synchronous>, transform_indices = @transform_6, window_bounds = array<i64: 32, 8>}, {pipeline_mode = #tpu.pipeline_mode<synchronous>, transform_indices = @transform_7, window_bounds = array<i64: 1, 8>}, {pipeline_mode = #tpu.pipeline_mode<synchronous>, transform_indices = @transform_8, window_bounds = array<i64: 1, 8>}, {transform_indices = @transform_9, window_bounds = array<i64: 256, 8>}, {transform_indices = @transform_10, window_bounds = array<i64: 256, 8>}]} {
    %c0 = arith.constant 0 : index
    %c0_0 = arith.constant 0 : index
    %0 = vector.load %arg1[%c0, %c0_0] : memref<256x16xf32, #tpu.memory_space<vmem>>, vector<256x16xf32>
    %c0_1 = arith.constant 0 : index
    %c0_2 = arith.constant 0 : index
    %1 = vector.load %arg3[%c0_1, %c0_2] : memref<16x32xf32, #tpu.memory_space<vmem>>, vector<16x32xf32>
    %cst = arith.constant dense<0.000000e+00> : vector<256x32xf32>
    %2 = tpu.matmul %0, %1, %cst {dimension_numbers = #tpu.dot_dimension_numbers<[1], [0], [0], [1], [0, 0, 1, 1], [], []>} : vector<256x16xf32>, vector<16x32xf32>, vector<256x32xf32> -> vector<256x32xf32>
    %c0_3 = arith.constant 0 : index
    %c0_4 = arith.constant 0 : index
    %3 = vector.load %arg4[%c0_3, %c0_4] : memref<1x32xf32, #tpu.memory_space<vmem>>, vector<1x32xf32>
    %4 = vector.broadcast %3 : vector<1x32xf32> to vector<256x32xf32>
    %5 = arith.addf %2, %4 : vector<256x32xf32>
    %6 = math.tanh %5 : vector<256x32xf32>
    %c0_5 = arith.constant 0 : index
    %c0_6 = arith.constant 0 : index
    %7 = vector.load %arg5[%c0_5, %c0_6] : memref<32x32xf32, #tpu.memory_space<vmem>>, vector<32x32xf32>
    %cst_7 = arith.constant dense<0.000000e+00> : vector<256x32xf32>
    %8 = tpu.matmul %6, %7, %cst_7 {dimension_numbers = #tpu.dot_dimension_numbers<[1], [0], [0], [1], [0, 0, 1, 1], [], []>} : vector<256x32xf32>, vector<32x32xf32>, vector<256x32xf32> -> vector<256x32xf32>
    %c0_8 = arith.constant 0 : index
    %c0_9 = arith.constant 0 : index
    %9 = vector.load %arg6[%c0_8, %c0_9] : memref<1x32xf32, #tpu.memory_space<vmem>>, vector<1x32xf32>
    %10 = vector.broadcast %9 : vector<1x32xf32> to vector<256x32xf32>
    %11 = arith.addf %8, %10 : vector<256x32xf32>
    %12 = math.tanh %11 : vector<256x32xf32>
    %c0_10 = arith.constant 0 : index
    %c0_11 = arith.constant 0 : index
    %13 = vector.load %arg7[%c0_10, %c0_11] : memref<32x8xf32, #tpu.memory_space<vmem>>, vector<32x8xf32>
    %cst_12 = arith.constant dense<0.000000e+00> : vector<256x8xf32>
    %14 = tpu.matmul %12, %13, %cst_12 {dimension_numbers = #tpu.dot_dimension_numbers<[1], [0], [0], [1], [0, 0, 1, 1], [], []>} : vector<256x32xf32>, vector<32x8xf32>, vector<256x8xf32> -> vector<256x8xf32>
    %c0_13 = arith.constant 0 : index
    %c0_14 = arith.constant 0 : index
    %15 = vector.load %arg8[%c0_13, %c0_14] : memref<1x8xf32, #tpu.memory_space<vmem>>, vector<1x8xf32>
    %16 = vector.broadcast %15 : vector<1x8xf32> to vector<256x8xf32>
    %17 = arith.addf %14, %16 : vector<256x8xf32>
    %c0_15 = arith.constant 0 : index
    %c0_16 = arith.constant 0 : index
    %18 = vector.load %arg11[%c0_15, %c0_16] : memref<256x8xf32, #tpu.memory_space<vmem>>, vector<256x8xf32>
    tpu.vector_store %arg11[%c0_15, %c0_16], %17 {strides = array<i32>} : memref<256x8xf32, #tpu.memory_space<vmem>>, vector<256x8xf32>,
    %c0_17 = arith.constant 0 : index
    %c0_18 = arith.constant 0 : index
    %19 = vector.load %arg9[%c0_17, %c0_18] : memref<1x8xf32, #tpu.memory_space<vmem>>, vector<1x8xf32>
    %c0_19 = arith.constant 0 : index
    %c0_20 = arith.constant 0 : index
    %20 = vector.load %arg2[%c0_19, %c0_20] : memref<256x8xf32, #tpu.memory_space<vmem>>, vector<256x8xf32>
    %21 = vector.broadcast %19 : vector<1x8xf32> to vector<256x8xf32>
    %22 = arith.mulf %21, %20 : vector<256x8xf32>
    %23 = arith.addf %17, %22 : vector<256x8xf32>
    %c0_21 = arith.constant 0 : index
    %c0_22 = arith.constant 0 : index
    %24 = vector.load %arg10[%c0_21, %c0_22] : memref<256x8xf32, #tpu.memory_space<vmem>>, vector<256x8xf32>
    tpu.vector_store %arg10[%c0_21, %c0_22], %23 {strides = array<i32>} : memref<256x8xf32, #tpu.memory_space<vmem>>, vector<256x8xf32>,
    return
  }
  func.func @transform_0(%arg0: i32) -> (i32, i32) {
    %c0_i32 = arith.constant 0 : i32
    %c0_i32_0 = arith.constant 0 : i32
    return %arg0, %c0_i32 : i32, i32
  }
  func.func @transform_1(%arg0: i32) -> (i32, i32) {
    %c0_i32 = arith.constant 0 : i32
    %c0_i32_0 = arith.constant 0 : i32
    return %arg0, %c0_i32 : i32, i32
  }
  func.func @transform_2(%arg0: i32) -> (i32, i32) {
    %c0_i32 = arith.constant 0 : i32
    %c0_i32_0 = arith.constant 0 : i32
    %c0_i32_1 = arith.constant 0 : i32
    return %c0_i32, %c0_i32_0 : i32, i32
  }
  func.func @transform_3(%arg0: i32) -> (i32, i32) {
    %c0_i32 = arith.constant 0 : i32
    %c0_i32_0 = arith.constant 0 : i32
    %c0_i32_1 = arith.constant 0 : i32
    return %c0_i32, %c0_i32_0 : i32, i32
  }
  func.func @transform_4(%arg0: i32) -> (i32, i32) {
    %c0_i32 = arith.constant 0 : i32
    %c0_i32_0 = arith.constant 0 : i32
    %c0_i32_1 = arith.constant 0 : i32
    return %c0_i32, %c0_i32_0 : i32, i32
  }
  func.func @transform_5(%arg0: i32) -> (i32, i32) {
    %c0_i32 = arith.constant 0 : i32
    %c0_i32_0 = arith.constant 0 : i32
    %c0_i32_1 = arith.constant 0 : i32
    return %c0_i32, %c0_i32_0 : i32, i32
  }
  func.func @transform_6(%arg0: i32) -> (i32, i32) {
    %c0_i32 = arith.constant 0 : i32
    %c0_i32_0 = arith.constant 0 : i32
    %c0_i32_1 = arith.constant 0 : i32
    return %c0_i32, %c0_i32_0 : i32, i32
  }
  func.func @transform_7(%arg0: i32) -> (i32, i32) {
    %c0_i32 = arith.constant 0 : i32
    %c0_i32_0 = arith.constant 0 : i32
    %c0_i32_1 = arith.constant 0 : i32
    return %c0_i32, %c0_i32_0 : i32, i32
  }
  func.func @transform_8(%arg0: i32) -> (i32, i32) {
    %c0_i32 = arith.constant 0 : i32
    %c0_i32_0 = arith.constant 0 : i32
    %c0_i32_1 = arith.constant 0 : i32
    return %c0_i32, %c0_i32_0 : i32, i32
  }
  func.func @transform_9(%arg0: i32) -> (i32, i32) {
    %c0_i32 = arith.constant 0 : i32
    %c0_i32_0 = arith.constant 0 : i32
    return %arg0, %c0_i32 : i32, i32
  }
  func.func @transform_10(%arg0: i32) -> (i32, i32) {
    %c0_i32 = arith.constant 0 : i32
    %c0_i32_0 = arith.constant 0 : i32
    return %arg0, %c0_i32 : i32, i32
  }
}

</mosaic_0001>

<llo_original>
// kernel: tpu_custom_call.1
$region0: #{tpu_custom_call.1}
  #allocation0 [shape = 'u32[]', space=smem, size = 0x4, offset = 0x4, fixed_abs, tag = 'smem constant byte address 0x4 - core index']
  #allocation1 [shape = 'u32[144,128]{1,0:T(1,128)}', space=vmem, size = 0x12000, scoped, tag = 'internal scratch']
  %s0 = inlined_call_operand.vmem [shape: f32[512,16], index: 0, kind: input, shape index: {}]
  %s1 = inlined_call_operand.vmem [shape: f32[512,8], index: 1, kind: input, shape index: {}]
  %s2 = inlined_call_operand.vmem [shape: f32[16,32], index: 2, kind: input, shape index: {}]
  %s3 = inlined_call_operand.vmem [shape: f32[1,32], index: 3, kind: input, shape index: {}]
  %s4 = inlined_call_operand.vmem [shape: f32[32,32], index: 4, kind: input, shape index: {}]
  %s5 = inlined_call_operand.vmem [shape: f32[1,32], index: 5, kind: input, shape index: {}]
  %s6 = inlined_call_operand.vmem [shape: f32[32,8], index: 6, kind: input, shape index: {}]
  %s7 = inlined_call_operand.vmem [shape: f32[1,8], index: 7, kind: input, shape index: {}]
  %s8 = inlined_call_operand.vmem [shape: f32[1,8], index: 8, kind: input, shape index: {}]
  %s9 = inlined_call_operand.vmem [shape: f32[512,8], index: 9, kind: output, shape index: {0}]
  %s10 = inlined_call_operand.vmem [shape: f32[512,8], index: 10, kind: output, shape index: {1}]
  %11 = xla_tuple %s9, %s10
  %s12 = sld [smem:[#allocation0]]
  $region77: #{tpu_custom_call.1} parent=0
    _
  %s14 = ssub.s32 1, %s12
  %s15 = scalar_select 0, %s14, %s12
  loop: start=0, step=1, limit=4
  $region2: #{tpu_custom_call.1} parent=0 // loop_pre_header
    _
  $region3: #{tpu_custom_call.1} parent=0 // loop_header
    %s17 = sphi 0, %s21
    %p18 = scmp.ge.s32.totalorder %s17, 4
    %s27 = sphi 0, %s29
    %s30 = sphi 0, %s27
    %s31 = sphi 0, %s30
    %s47 = sphi 0, %s31
    %s53 = sphi 0, %s55
    %s56 = sphi 0, %s53
    %s57 = sphi 0, %s56
    %s73 = sphi 0, %s57
    %s77 = sphi 0, %s77
    %s79 = sphi 0, %s77
    %s80 = sphi 0, %s79
    %s94 = sphi 0, %s80
    %s98 = sphi 0, %s98
    %s100 = sphi 0, %s98
    %s101 = sphi 0, %s100
    %s115 = sphi 0, %s101
    %s119 = sphi 0, %s119
    %s121 = sphi 0, %s119
    %s122 = sphi 0, %s121
    %s136 = sphi 0, %s122
    %s140 = sphi 0, %s140
    %s142 = sphi 0, %s140
    %s143 = sphi 0, %s142
    %s157 = sphi 0, %s143
    %s161 = sphi 0, %s161
    %s163 = sphi 0, %s161
    %s164 = sphi 0, %s163
    %s178 = sphi 0, %s164
    %s182 = sphi 0, %s182
    %s184 = sphi 0, %s182
    %s185 = sphi 0, %s184
    %s199 = sphi 0, %s185
    %s203 = sphi 0, %s203
    %s205 = sphi 0, %s203
    %s206 = sphi 0, %s205
    %s220 = sphi 0, %s206
    %s226 = sphi 0, %s228
    %s229 = sphi 0, %s226
    %s230 = sphi 0, %s229
    %s246 = sphi 0, %s230
    %s252 = sphi 0, %s254
    %s255 = sphi 0, %s252
    %s256 = sphi 0, %s255
    %s272 = sphi 0, %s256
  $region4: #{tpu_custom_call.1} parent=0 // loop_header_branch
    %20 = sbr.rel (%p18) target = $region8
  $region5: #{tpu_custom_call.1} parent=0 // loop_body
    %s22 = ssub.s32 %s17, 1
    %s23 = ssub.s32 %s17, 2
    %s24 = sadd.s32 %s17, 1
    %s25 = ssub.s32 %s17, %s24
    %p26 = scmp.eq.s32.totalorder %s25, 0
    %s28 = sadd.s32 %s27, 1
    %s29 = scalar_select %p26, %s27, %s28
    %p32 = pneg %p26
    %p33 = scmp.eq.s32.totalorder %s17, 1
    %p34 = por %p32, %p33
    %p35 = scmp.ne.s32.totalorder %s27, %s30
    %p36 = scmp.eq.s32.totalorder %s17, 0
    %p37 = por %p35, %p36
    %p38 = scmp.ne.s32.totalorder %s27, %s30
    %p39 = scmp.eq.s32.totalorder %s22, 1
    %p40 = por %p38, %p39
    %p41 = scmp.ne.s32.totalorder %s30, %s31
    %p42 = scmp.eq.s32.totalorder %s22, 0
    %p43 = por %p41, %p42
    %p44 = scmp.ne.s32.totalorder %s30, %s31
    %p45 = scmp.eq.s32.totalorder %s23, 1
    %p46 = por %p44, %p45
    %p48 = scmp.ne.s32.totalorder %s31, %s47
    %p49 = scmp.eq.s32.totalorder %s23, 0
    %p50 = por %p48, %p49
    %s51 = ssub.s32 %s17, %s24
    %p52 = scmp.eq.s32.totalorder %s51, 0
    %s54 = sadd.s32 %s53, 1
    %s55 = scalar_select %p52, %s53, %s54
    %p58 = pneg %p52
    %p59 = scmp.eq.s32.totalorder %s17, 1
    %p60 = por %p58, %p59
    %p61 = scmp.ne.s32.totalorder %s53, %s56
    %p62 = scmp.eq.s32.totalorder %s17, 0
    %p63 = por %p61, %p62
    %p64 = scmp.ne.s32.totalorder %s53, %s56
    %p65 = scmp.eq.s32.totalorder %s22, 1
    %p66 = por %p64, %p65
    %p67 = scmp.ne.s32.totalorder %s56, %s57
    %p68 = scmp.eq.s32.totalorder %s22, 0
    %p69 = por %p67, %p68
    %p70 = scmp.ne.s32.totalorder %s56, %s57
    %p71 = scmp.eq.s32.totalorder %s23, 1
    %p72 = por %p70, %p71
    %p74 = scmp.ne.s32.totalorder %s57, %s73
    %p75 = scmp.eq.s32.totalorder %s23, 0
    %p76 = por %p74, %p75
    %s78 = sadd.s32 %s77, 1
    %p81 = scmp.eq.s32.totalorder %s17, 1
    %p82 = scmp.ne.s32.totalorder %s77, %s79
    %p83 = scmp.eq.s32.totalorder %s17, 0
    %p84 = por %p82, %p83
    %p85 = scmp.ne.s32.totalorder %s77, %s79
    %p86 = scmp.eq.s32.totalorder %s22, 1
    %p87 = por %p85, %p86
    %p88 = scmp.ne.s32.totalorder %s79, %s80
    %p89 = scmp.eq.s32.totalorder %s22, 0
    %p90 = por %p88, %p89
    %p91 = scmp.ne.s32.totalorder %s79, %s80
    %p92 = scmp.eq.s32.totalorder %s23, 1
    %p93 = por %p91, %p92
    %p95 = scmp.ne.s32.totalorder %s80, %s94
    %p96 = scmp.eq.s32.totalorder %s23, 0
    %p97 = por %p95, %p96
    %s99 = sadd.s32 %s98, 1
    %p102 = scmp.eq.s32.totalorder %s17, 1
    %p103 = scmp.ne.s32.totalorder %s98, %s100
    %p104 = scmp.eq.s32.totalorder %s17, 0
    %p105 = por %p103, %p104
    %p106 = scmp.ne.s32.totalorder %s98, %s100
    %p107 = scmp.eq.s32.totalorder %s22, 1
    %p108 = por %p106, %p107
    %p109 = scmp.ne.s32.totalorder %s100, %s101
    %p110 = scmp.eq.s32.totalorder %s22, 0
    %p111 = por %p109, %p110
    %p112 = scmp.ne.s32.totalorder %s100, %s101
    %p113 = scmp.eq.s32.totalorder %s23, 1
    %p114 = por %p112, %p113
    %p116 = scmp.ne.s32.totalorder %s101, %s115
    %p117 = scmp.eq.s32.totalorder %s23, 0
    %p118 = por %p116, %p117
    %s120 = sadd.s32 %s119, 1
    %p123 = scmp.eq.s32.totalorder %s17, 1
    %p124 = scmp.ne.s32.totalorder %s119, %s121
    %p125 = scmp.eq.s32.totalorder %s17, 0
    %p126 = por %p124, %p125
    %p127 = scmp.ne.s32.totalorder %s119, %s121
    %p128 = scmp.eq.s32.totalorder %s22, 1
    %p129 = por %p127, %p128
    %p130 = scmp.ne.s32.totalorder %s121, %s122
    %p131 = scmp.eq.s32.totalorder %s22, 0
    %p132 = por %p130, %p131
    %p133 = scmp.ne.s32.totalorder %s121, %s122
    %p134 = scmp.eq.s32.totalorder %s23, 1
    %p135 = por %p133, %p134
    %p137 = scmp.ne.s32.totalorder %s122, %s136
    %p138 = scmp.eq.s32.totalorder %s23, 0
    %p139 = por %p137, %p138
    %s141 = sadd.s32 %s140, 1
    %p144 = scmp.eq.s32.totalorder %s17, 1
    %p145 = scmp.ne.s32.totalorder %s140, %s142
    %p146 = scmp.eq.s32.totalorder %s17, 0
    %p147 = por %p145, %p146
    %p148 = scmp.ne.s32.totalorder %s140, %s142
    %p149 = scmp.eq.s32.totalorder %s22, 1
    %p150 = por %p148, %p149
    %p151 = scmp.ne.s32.totalorder %s142, %s143
    %p152 = scmp.eq.s32.totalorder %s22, 0
    %p153 = por %p151, %p152
    %p154 = scmp.ne.s32.totalorder %s142, %s143
    %p155 = scmp.eq.s32.totalorder %s23, 1
    %p156 = por %p154, %p155
    %p158 = scmp.ne.s32.totalorder %s143, %s157
    %p159 = scmp.eq.s32.totalorder %s23, 0
    %p160 = por %p158, %p159
    %s162 = sadd.s32 %s161, 1
    %p165 = scmp.eq.s32.totalorder %s17, 1
    %p166 = scmp.ne.s32.totalorder %s161, %s163
    %p167 = scmp.eq.s32.totalorder %s17, 0
    %p168 = por %p166, %p167
    %p169 = scmp.ne.s32.totalorder %s161, %s163
    %p170 = scmp.eq.s32.totalorder %s22, 1
    %p171 = por %p169, %p170
    %p172 = scmp.ne.s32.totalorder %s163, %s164
    %p173 = scmp.eq.s32.totalorder %s22, 0
    %p174 = por %p172, %p173
    %p175 = scmp.ne.s32.totalorder %s163, %s164
    %p176 = scmp.eq.s32.totalorder %s23, 1
    %p177 = por %p175, %p176
    %p179 = scmp.ne.s32.totalorder %s164, %s178
    %p180 = scmp.eq.s32.totalorder %s23, 0
    %p181 = por %p179, %p180
    %s183 = sadd.s32 %s182, 1
    %p186 = scmp.eq.s32.totalorder %s17, 1
    %p187 = scmp.ne.s32.totalorder %s182, %s184
    %p188 = scmp.eq.s32.totalorder %s17, 0
    %p189 = por %p187, %p188
    %p190 = scmp.ne.s32.totalorder %s182, %s184
    %p191 = scmp.eq.s32.totalorder %s22, 1
    %p192 = por %p190, %p191
    %p193 = scmp.ne.s32.totalorder %s184, %s185
    %p194 = scmp.eq.s32.totalorder %s22, 0
    %p195 = por %p193, %p194
    %p196 = scmp.ne.s32.totalorder %s184, %s185
    %p197 = scmp.eq.s32.totalorder %s23, 1
    %p198 = por %p196, %p197
    %p200 = scmp.ne.s32.totalorder %s185, %s199
    %p201 = scmp.eq.s32.totalorder %s23, 0
    %p202 = por %p200, %p201
    %s204 = sadd.s32 %s203, 1
    %p207 = scmp.eq.s32.totalorder %s17, 1
    %p208 = scmp.ne.s32.totalorder %s203, %s205
    %p209 = scmp.eq.s32.totalorder %s17, 0
    %p210 = por %p208, %p209
    %p211 = scmp.ne.s32.totalorder %s203, %s205
    %p212 = scmp.eq.s32.totalorder %s22, 1
    %p213 = por %p211, %p212
    %p214 = scmp.ne.s32.totalorder %s205, %s206
    %p215 = scmp.eq.s32.totalorder %s22, 0
    %p216 = por %p214, %p215
    %p217 = scmp.ne.s32.totalorder %s205, %s206
    %p218 = scmp.eq.s32.totalorder %s23, 1
    %p219 = por %p217, %p218
    %p221 = scmp.ne.s32.totalorder %s206, %s220
    %p222 = scmp.eq.s32.totalorder %s23, 0
    %p223 = por %p221, %p222
    %s224 = ssub.s32 %s17, %s24
    %p225 = scmp.eq.s32.totalorder %s224, 0
    %s227 = sadd.s32 %s226, 1
    %s228 = scalar_select %p225, %s226, %s227
    %p231 = pneg %p225
    %p232 = scmp.eq.s32.totalorder %s17, 1
    %p233 = por %p231, %p232
    %p234 = scmp.ne.s32.totalorder %s226, %s229
    %p235 = scmp.eq.s32.totalorder %s17, 0
    %p236 = por %p234, %p235
    %p237 = scmp.ne.s32.totalorder %s226, %s229
    %p238 = scmp.eq.s32.totalorder %s22, 1
    %p239 = por %p237, %p238
    %p240 = scmp.ne.s32.totalorder %s229, %s230
    %p241 = scmp.eq.s32.totalorder %s22, 0
    %p242 = por %p240, %p241
    %p243 = scmp.ne.s32.totalorder %s229, %s230
    %p244 = scmp.eq.s32.totalorder %s23, 1
    %p245 = por %p243, %p244
    %p247 = scmp.ne.s32.totalorder %s230, %s246
    %p248 = scmp.eq.s32.totalorder %s23, 0
    %p249 = por %p247, %p248
    %s250 = ssub.s32 %s17, %s24
    %p251 = scmp.eq.s32.totalorder %s250, 0
    %s253 = sadd.s32 %s252, 1
    %s254 = scalar_select %p251, %s252, %s253
    %p257 = pneg %p251
    %p258 = scmp.eq.s32.totalorder %s17, 1
    %p259 = por %p257, %p258
    %p260 = scmp.ne.s32.totalorder %s252, %s255
    %p261 = scmp.eq.s32.totalorder %s17, 0
    %p262 = por %p260, %p261
    %p263 = scmp.ne.s32.totalorder %s252, %s255
    %p264 = scmp.eq.s32.totalorder %s22, 1
    %p265 = por %p263, %p264
    %p266 = scmp.ne.s32.totalorder %s255, %s256
    %p267 = scmp.eq.s32.totalorder %s22, 0
    %p268 = por %p266, %p267
    %p269 = scmp.ne.s32.totalorder %s255, %s256
    %p270 = scmp.eq.s32.totalorder %s23, 1
    %p271 = por %p269, %p270
    %p273 = scmp.ne.s32.totalorder %s256, %s272
    %p274 = scmp.eq.s32.totalorder %s23, 0
    %p275 = por %p273, %p274
    %p276 = scmp.le.s32.totalorder 1, %s17
    %p277 = scmp.lt.s32.totalorder %s17, 3
    %p278 = pnand %p276, %p277
    %p279 = pneg %p278
    // Predicated region
    $region9: #{tpu_custom_call.1} parent=5 // pred_check
      _
    $region10: #{tpu_custom_call.1} parent=5 // pred_check_branch
      %281 = sbr.rel (%p278) target = $region12
    $region11: #{tpu_custom_call.1} parent=5 // pred_region
      %s282 = ssub.s32 %s17, 1
      // Predicated region
      $region13: #{tpu_custom_call.1} parent=11 // pred_check
        %p283 = pneg %p90
      $region14: #{tpu_custom_call.1} parent=11 // pred_check_branch
        %285 = sbr.rel (%p283) target = $region16
      $region15: #{tpu_custom_call.1} parent=11 // pred_region
        _
      $region16: #{tpu_custom_call.1} parent=11 // pred_fallthru
        _
      // Predicated region
      $region17: #{tpu_custom_call.1} parent=11 // pred_check
        %p286 = pneg %p111
      $region18: #{tpu_custom_call.1} parent=11 // pred_check_branch
        %288 = sbr.rel (%p286) target = $region20
      $region19: #{tpu_custom_call.1} parent=11 // pred_region
        _
      $region20: #{tpu_custom_call.1} parent=11 // pred_fallthru
        _
      // Predicated region
      $region21: #{tpu_custom_call.1} parent=11 // pred_check
        %p289 = pneg %p132
      $region22: #{tpu_custom_call.1} parent=11 // pred_check_branch
        %291 = sbr.rel (%p289) target = $region24
      $region23: #{tpu_custom_call.1} parent=11 // pred_region
        _
      $region24: #{tpu_custom_call.1} parent=11 // pred_fallthru
        _
      // Predicated region
      $region25: #{tpu_custom_call.1} parent=11 // pred_check
        %p292 = pneg %p153
      $region26: #{tpu_custom_call.1} parent=11 // pred_check_branch
        %294 = sbr.rel (%p292) target = $region28
      $region27: #{tpu_custom_call.1} parent=11 // pred_region
        _
      $region28: #{tpu_custom_call.1} parent=11 // pred_fallthru
        _
      // Predicated region
      $region29: #{tpu_custom_call.1} parent=11 // pred_check
        %p295 = pneg %p174
      $region30: #{tpu_custom_call.1} parent=11 // pred_check_branch
        %297 = sbr.rel (%p295) target = $region32
      $region31: #{tpu_custom_call.1} parent=11 // pred_region
        _
      $region32: #{tpu_custom_call.1} parent=11 // pred_fallthru
        _
      // Predicated region
      $region33: #{tpu_custom_call.1} parent=11 // pred_check
        %p298 = pneg %p195
      $region34: #{tpu_custom_call.1} parent=11 // pred_check_branch
        %300 = sbr.rel (%p298) target = $region36
      $region35: #{tpu_custom_call.1} parent=11 // pred_region
        _
      $region36: #{tpu_custom_call.1} parent=11 // pred_fallthru
        _
      // Predicated region
      $region37: #{tpu_custom_call.1} parent=11 // pred_check
        %p301 = pneg %p216
      $region38: #{tpu_custom_call.1} parent=11 // pred_check_branch
        %303 = sbr.rel (%p301) target = $region40
      $region39: #{tpu_custom_call.1} parent=11 // pred_region
        _
      $region40: #{tpu_custom_call.1} parent=11 // pred_fallthru
        _
    $region12: #{tpu_custom_call.1} parent=5 // pred_fallthru
      _
    %p304 = scmp.lt.s32.totalorder %s17, 2
    // Predicated region
    $region41: #{tpu_custom_call.1} parent=5 // pred_check
      %p305 = pneg %p304
    $region42: #{tpu_custom_call.1} parent=5 // pred_check_branch
      %307 = sbr.rel (%p305) target = $region44
    $region43: #{tpu_custom_call.1} parent=5 // pred_region
      // Predicated region
      $region45: #{tpu_custom_call.1} parent=43 // pred_check
        %p308 = pneg %p37
      $region46: #{tpu_custom_call.1} parent=43 // pred_check_branch
        %310 = sbr.rel (%p308) target = $region48
      $region47: #{tpu_custom_call.1} parent=43 // pred_region
        %s311 = smul.u32 32, %s17
        %p312 = scmp.lt.s32.totalorder %s311, 63
        %s313 = scalar_select %p312, %s311, 63
        %s314 = smul.addr %s313, 8
        %s315 = scalar_lea.vmem %s0, %s314
        %s316 = smul.u32 32, %s17
      $region48: #{tpu_custom_call.1} parent=43 // pred_fallthru
        _
      // Predicated region
      $region49: #{tpu_custom_call.1} parent=43 // pred_check
        %p317 = pneg %p63
      $region50: #{tpu_custom_call.1} parent=43 // pred_check_branch
        %319 = sbr.rel (%p317) target = $region52
      $region51: #{tpu_custom_call.1} parent=43 // pred_region
        %s320 = smul.u32 32, %s17
        %p321 = scmp.lt.s32.totalorder %s320, 63
        %s322 = scalar_select %p321, %s320, 63
        %s323 = smul.addr %s322, 8
        %s324 = scalar_lea.vmem %s1, %s323
        %s325 = smul.u32 32, %s17
      $region52: #{tpu_custom_call.1} parent=43 // pred_fallthru
        _
    $region44: #{tpu_custom_call.1} parent=5 // pred_fallthru
      _
    %p326 = scmp.le.s32.totalorder 1, %s17
    %p327 = scmp.lt.s32.totalorder %s17, 3
    %p328 = pnand %p326, %p327
    %p329 = pneg %p328
    // Predicated region
    $region53: #{tpu_custom_call.1} parent=5 // pred_check
      _
    $region54: #{tpu_custom_call.1} parent=5 // pred_check_branch
      %331 = sbr.rel (%p328) target = $region56
    $region55: #{tpu_custom_call.1} parent=5 // pred_region
      %s332 = ssub.s32 %s17, 1
      %s333 = smul.u32 32, %s22
      %p334 = scmp.lt.s32.totalorder %s333, 63
      %s335 = scalar_select %p334, %s333, 63
      %s336 = smul.addr %s335, 8
      %s337 = scalar_lea.vmem %s0, %s336
      %p338 = pneg %p43
      %p339 = pneg %p40
      %s340 = smul.u32 32, %s22
      %p341 = scmp.lt.s32.totalorder %s340, 63
      %s342 = scalar_select %p341, %s340, 63
      %s343 = smul.addr %s342, 8
      %s344 = scalar_lea.vmem %s1, %s343
      %p345 = pneg %p69
      %p346 = pneg %p66
      %p347 = pneg %p90
      %p348 = pneg %p87
      %p349 = pneg %p111
      %p350 = pneg %p108
      %p351 = pneg %p132
      %p352 = pneg %p129
      %p353 = pneg %p153
      %p354 = pneg %p150
      %p355 = pneg %p174
      %p356 = pneg %p171
      %p357 = pneg %p195
      %p358 = pneg %p192
      %p359 = pneg %p216
      %p360 = pneg %p213
      %p361 = pneg %p242
      %p362 = pneg %p239
      %s363 = smul.u32 32, %s22
      %p364 = scmp.lt.s32.totalorder %s363, 63
      %s365 = scalar_select %p364, %s363, 63
      %s366 = smul.addr %s365, 8
      %s367 = scalar_lea.vmem %s9, %s366
      %p368 = pneg %p268
      %p369 = pneg %p265
      %s370 = smul.u32 32, %s22
      %p371 = scmp.lt.s32.totalorder %s370, 63
      %s372 = scalar_select %p371, %s370, 63
      %s373 = smul.addr %s372, 8
      %s374 = scalar_lea.vmem %s10, %s373
      %s375 = smul.u32 32, %s22
      %p376 = scmp.lt.s32.totalorder %s375, 63
      %s377 = scalar_select %p376, %s375, 63
      %s378 = smul.addr %s377, 8
      %s379 = scalar_lea.vmem %s0, %s378
      %s380 = smul.u32 32, %s22
      %s381 = smul.u32 32, %s22
      %p382 = scmp.lt.s32.totalorder %s381, 63
      %s383 = scalar_select %p382, %s381, 63
      %s384 = smul.addr %s383, 8
      %s385 = scalar_lea.vmem %s1, %s384
      %s386 = smul.u32 32, %s22
      %s387 = smul.u32 32, %s22
      %p388 = scmp.lt.s32.totalorder %s387, 63
      %s389 = scalar_select %p388, %s387, 63
      %s390 = smul.addr %s389, 8
      %s391 = scalar_lea.vmem %s9, %s390
      %s392 = smul.u32 32, %s22
      %s393 = smul.u32 32, %s22
      %p394 = scmp.lt.s32.totalorder %s393, 63
      %s395 = scalar_select %p394, %s393, 63
      %s396 = smul.addr %s395, 8
      %s397 = scalar_lea.vmem %s10, %s396
      %s398 = smul.u32 32, %s22
      %v399 = vld [vmem:[%s379] sm:$0xff]
      %v400 = vld [vmem:[%s379 + $0x8] sm:$0xff]
      %v401 = vld [vmem:[%s379 + $0x10] sm:$0xff]
      %v402 = vld [vmem:[%s379 + $0x18] sm:$0xff]
      %v403 = vld [vmem:[%s379 + $0x20] sm:$0xff]
      %v404 = vld [vmem:[%s379 + $0x28] sm:$0xff]
      %v405 = vld [vmem:[%s379 + $0x30] sm:$0xff]
      %v406 = vld [vmem:[%s379 + $0x38] sm:$0xff]
      %v407 = vld [vmem:[%s379 + $0x40] sm:$0xff]
      %v408 = vld [vmem:[%s379 + $0x48] sm:$0xff]
      %v409 = vld [vmem:[%s379 + $0x50] sm:$0xff]
      %v410 = vld [vmem:[%s379 + $0x58] sm:$0xff]
      %v411 = vld [vmem:[%s379 + $0x60] sm:$0xff]
      %v412 = vld [vmem:[%s379 + $0x68] sm:$0xff]
      %v413 = vld [vmem:[%s379 + $0x70] sm:$0xff]
      %v414 = vld [vmem:[%s379 + $0x78] sm:$0xff]
      %v415 = vld [vmem:[%s379 + $0x80] sm:$0xff]
      %v416 = vld [vmem:[%s379 + $0x88] sm:$0xff]
      %v417 = vld [vmem:[%s379 + $0x90] sm:$0xff]
      %v418 = vld [vmem:[%s379 + $0x98] sm:$0xff]
      %v419 = vld [vmem:[%s379 + $0xa0] sm:$0xff]
      %v420 = vld [vmem:[%s379 + $0xa8] sm:$0xff]
      %v421 = vld [vmem:[%s379 + $0xb0] sm:$0xff]
      %v422 = vld [vmem:[%s379 + $0xb8] sm:$0xff]
      %v423 = vld [vmem:[%s379 + $0xc0] sm:$0xff]
      %v424 = vld [vmem:[%s379 + $0xc8] sm:$0xff]
      %v425 = vld [vmem:[%s379 + $0xd0] sm:$0xff]
      %v426 = vld [vmem:[%s379 + $0xd8] sm:$0xff]
      %v427 = vld [vmem:[%s379 + $0xe0] sm:$0xff]
      %v428 = vld [vmem:[%s379 + $0xe8] sm:$0xff]
      %v429 = vld [vmem:[%s379 + $0xf0] sm:$0xff]
      %v430 = vld [vmem:[%s379 + $0xf8] sm:$0xff]
      %v431 = vld [vmem:[%s2] sm:$0xff]
      %v432 = vld [vmem:[%s2 + $0x8] sm:$0xff]
      %v433 = vld [vmem:[%s3] sm:$0x1]
      %v435 = vlaneseq
      %v436 = vshrl.u32 %v435, 7
      %v437 = vsub.s32 0, %v436
      %v438 = vrot.slane %v433, %v437
      %vm440 = vcmask 130048
      %v442 = vsel %vm440, %v399, 0
      %v445 = vsel %vm440, %v400, 0
      %v448 = vsel %vm440, %v401, 0
      %v451 = vsel %vm440, %v402, 0
      %v454 = vsel %vm440, %v403, 0
      %v457 = vsel %vm440, %v404, 0
      %v460 = vsel %vm440, %v405, 0
      %v463 = vsel %vm440, %v406, 0
      %v466 = vsel %vm440, %v407, 0
      %v469 = vsel %vm440, %v408, 0
      %v472 = vsel %vm440, %v409, 0
      %v475 = vsel %vm440, %v410, 0
      %v478 = vsel %vm440, %v411, 0
      %v481 = vsel %vm440, %v412, 0
      %v484 = vsel %vm440, %v413, 0
      %v487 = vsel %vm440, %v414, 0
      %v490 = vsel %vm440, %v415, 0
      %v493 = vsel %vm440, %v416, 0
      %v496 = vsel %vm440, %v417, 0
      %v499 = vsel %vm440, %v418, 0
      %v502 = vsel %vm440, %v419, 0
      %v505 = vsel %vm440, %v420, 0
      %v508 = vsel %vm440, %v421, 0
      %v511 = vsel %vm440, %v422, 0
      %v514 = vsel %vm440, %v423, 0
      %v517 = vsel %vm440, %v424, 0
      %v520 = vsel %vm440, %v425, 0
      %v523 = vsel %vm440, %v426, 0
      %v526 = vsel %vm440, %v427, 0
      %v529 = vsel %vm440, %v428, 0
      %v532 = vsel %vm440, %v429, 0
      %v535 = vsel %vm440, %v430, 0
      %537 = vmatprep.subr.mxu0 0.0
      %538 = vmatpush1.msra.mxu0 %v431
      %539 = vmatprep.subr.mxu0 0.0
      %540 = vmatpush1.msra.mxu0 %v432
      %541 = vmatprep.subr.mxu0 0.0
      %542 = vmatpush1.msra.mxu0 0.0
      %543 = vmatprep.subr.mxu0 0.0
      %544 = vmatpush1.msra.mxu0 0.0
      %545 = vmatprep.subr.mxu0 0.0
      %546 = vmatpush1.msra.mxu0 0.0
      %547 = vmatprep.subr.mxu0 0.0
      %548 = vmatpush1.msra.mxu0 0.0
      %549 = vmatprep.subr.mxu0 0.0
      %550 = vmatpush1.msra.mxu0 0.0
      %551 = vmatprep.subr.mxu0 0.0
      %552 = vmatpush1.msra.mxu0 0.0
      %553 = vmatprep.subr.mxu0 0.0
      %554 = vmatpush1.msra.mxu0 0.0
      %555 = vmatprep.subr.mxu0 0.0
      %556 = vmatpush1.msra.mxu0 0.0
      %557 = vmatprep.subr.mxu0 0.0
      %558 = vmatpush1.msra.mxu0 0.0
      %559 = vmatprep.subr.mxu0 0.0
      %560 = vmatpush1.msra.mxu0 0.0
      %561 = vmatprep.subr.mxu0 0.0
      %562 = vmatpush1.msra.mxu0 0.0
      %563 = vmatprep.subr.mxu0 0.0
      %564 = vmatpush1.msra.mxu0 0.0
      %565 = vmatprep.subr.mxu0 0.0
      %566 = vmatpush1.msra.mxu0 0.0
      %567 = vmatprep.subr.mxu0 0.0
      %568 = vmatpush1.msra.mxu0 0.0
      %569 = vmatprep.subr.mxu0 0.0
      %570 = vmatpush1.msra.mxu0 0.0
      %571 = vmatprep.subr.mxu0 0.0
      %572 = vmatpush1.msra.mxu0 0.0
      %573 = vmatprep.subr.mxu0 0.0
      %574 = vmatpush1.msra.mxu0 0.0
      %575 = vmatprep.subr.mxu0 0.0
      %576 = vmatpush1.msra.mxu0 0.0
      %577 = vmatprep.subr.mxu0 0.0
      %578 = vmatpush1.msra.mxu0 0.0
      %579 = vmatprep.subr.mxu0 0.0
      %580 = vmatpush1.msra.mxu0 0.0
      %581 = vmatprep.subr.mxu0 0.0
      %582 = vmatpush1.msra.mxu0 0.0
      %583 = vmatprep.subr.mxu0 0.0
      %584 = vmatpush1.msra.mxu0 0.0
      %585 = vmatprep.subr.mxu0 0.0
      %586 = vmatpush1.msra.mxu0 0.0
      %587 = vmatprep.subr.mxu0 0.0
      %588 = vmatpush1.msra.mxu0 0.0
      %589 = vmatprep.subr.mxu0 0.0
      %590 = vmatpush1.msra.mxu0 0.0
      %591 = vmatprep.subr.mxu0 0.0
      %592 = vmatpush1.msra.mxu0 0.0
      %593 = vmatprep.subr.mxu0 0.0
      %594 = vmatpush1.msra.mxu0 0.0
      %595 = vmatprep.subr.mxu0 0.0
      %596 = vmatpush1.msra.mxu0 0.0
      %597 = vmatprep.subr.mxu0 0.0
      %598 = vmatpush1.msra.mxu0 0.0
      %599 = vmatprep.subr.mxu0 0.0
      %600 = vmatpush1.msra.mxu0 0.0
      %601 = vmatprep.mubr.f32.mxu0 0.0
      %602 = vmatmul.mubr.f32.gmra.mrb[0].mxu0 %v442
      %v603 = vpop.f32.mrb[0].mxu0
      %v604 = vadd.f32 %v438, %v603
      %v605 = vpop.f32.mrb[0].mxu0
      %606 = vmatprep.mubr.f32.mxu0 0.0
      %607 = vmatmul.mubr.f32.gmra.mrb[0].mxu0 %v445
      %v608 = vpop.f32.mrb[0].mxu0
      %v609 = vadd.f32 %v438, %v608
      %v610 = vpop.f32.mrb[0].mxu0
      %611 = vmatprep.mubr.f32.mxu0 0.0
      %612 = vmatmul.mubr.f32.gmra.mrb[0].mxu0 %v448
      %v613 = vpop.f32.mrb[0].mxu0
      %v614 = vadd.f32 %v438, %v613
      %v615 = vpop.f32.mrb[0].mxu0
      %616 = vmatprep.mubr.f32.mxu0 0.0
      %617 = vmatmul.mubr.f32.gmra.mrb[0].mxu0 %v451
      %v618 = vpop.f32.mrb[0].mxu0
      %v619 = vadd.f32 %v438, %v618
      %v620 = vpop.f32.mrb[0].mxu0
      %621 = vmatprep.mubr.f32.mxu0 0.0
      %622 = vmatmul.mubr.f32.gmra.mrb[0].mxu0 %v454
      %v623 = vpop.f32.mrb[0].mxu0
      %v624 = vadd.f32 %v438, %v623
      %v625 = vpop.f32.mrb[0].mxu0
      %626 = vmatprep.mubr.f32.mxu0 0.0
      %627 = vmatmul.mubr.f32.gmra.mrb[0].mxu0 %v457
      %v628 = vpop.f32.mrb[0].mxu0
      %v629 = vadd.f32 %v438, %v628
      %v630 = vpop.f32.mrb[0].mxu0
      %631 = vmatprep.mubr.f32.mxu0 0.0
      %632 = vmatmul.mubr.f32.gmra.mrb[0].mxu0 %v460
      %v633 = vpop.f32.mrb[0].mxu0
      %v634 = vadd.f32 %v438, %v633
      %v635 = vpop.f32.mrb[0].mxu0
      %636 = vmatprep.mubr.f32.mxu0 0.0
      %637 = vmatmul.mubr.f32.gmra.mrb[0].mxu0 %v463
      %v638 = vpop.f32.mrb[0].mxu0
      %v639 = vadd.f32 %v438, %v638
      %v640 = vpop.f32.mrb[0].mxu0
      %641 = vmatprep.mubr.f32.mxu0 0.0
      %642 = vmatmul.mubr.f32.gmra.mrb[0].mxu0 %v466
      %v643 = vpop.f32.mrb[0].mxu0
      %v644 = vadd.f32 %v438, %v643
      %v645 = vpop.f32.mrb[0].mxu0
      %646 = vmatprep.mubr.f32.mxu0 0.0
      %647 = vmatmul.mubr.f32.gmra.mrb[0].mxu0 %v469
      %v648 = vpop.f32.mrb[0].mxu0
      %v649 = vadd.f32 %v438, %v648
      %v650 = vpop.f32.mrb[0].mxu0
      %651 = vmatprep.mubr.f32.mxu0 0.0
      %652 = vmatmul.mubr.f32.gmra.mrb[0].mxu0 %v472
      %v653 = vpop.f32.mrb[0].mxu0
      %v654 = vadd.f32 %v438, %v653
      %v655 = vpop.f32.mrb[0].mxu0
      %656 = vmatprep.mubr.f32.mxu0 0.0
      %657 = vmatmul.mubr.f32.gmra.mrb[0].mxu0 %v475
      %v658 = vpop.f32.mrb[0].mxu0
      %v659 = vadd.f32 %v438, %v658
      %v660 = vpop.f32.mrb[0].mxu0
      %661 = vmatprep.mubr.f32.mxu0 0.0
      %662 = vmatmul.mubr.f32.gmra.mrb[0].mxu0 %v478
      %v663 = vpop.f32.mrb[0].mxu0
      %v664 = vadd.f32 %v438, %v663
      %v665 = vpop.f32.mrb[0].mxu0
      %666 = vmatprep.mubr.f32.mxu0 0.0
      %667 = vmatmul.mubr.f32.gmra.mrb[0].mxu0 %v481
      %v668 = vpop.f32.mrb[0].mxu0
      %v669 = vadd.f32 %v438, %v668
      %v670 = vpop.f32.mrb[0].mxu0
      %671 = vmatprep.mubr.f32.mxu0 0.0
      %672 = vmatmul.mubr.f32.gmra.mrb[0].mxu0 %v484
      %v673 = vpop.f32.mrb[0].mxu0
      %v674 = vadd.f32 %v438, %v673
      %v675 = vpop.f32.mrb[0].mxu0
      %676 = vmatprep.mubr.f32.mxu0 0.0
      %677 = vmatmul.mubr.f32.gmra.mrb[0].mxu0 %v487
      %v678 = vpop.f32.mrb[0].mxu0
      %v679 = vadd.f32 %v438, %v678
      %v680 = vpop.f32.mrb[0].mxu0
      %681 = vmatprep.mubr.f32.mxu0 0.0
      %682 = vmatmul.mubr.f32.gmra.mrb[0].mxu0 %v490
      %v683 = vpop.f32.mrb[0].mxu0
      %v684 = vadd.f32 %v438, %v683
      %v685 = vpop.f32.mrb[0].mxu0
      %686 = vmatprep.mubr.f32.mxu0 0.0
      %687 = vmatmul.mubr.f32.gmra.mrb[0].mxu0 %v493
      %v688 = vpop.f32.mrb[0].mxu0
      %v689 = vadd.f32 %v438, %v688
      %v690 = vpop.f32.mrb[0].mxu0
      %691 = vmatprep.mubr.f32.mxu0 0.0
      %692 = vmatmul.mubr.f32.gmra.mrb[0].mxu0 %v496
      %v693 = vpop.f32.mrb[0].mxu0
      %v694 = vadd.f32 %v438, %v693
      %v695 = vpop.f32.mrb[0].mxu0
      %696 = vmatprep.mubr.f32.mxu0 0.0
      %697 = vmatmul.mubr.f32.gmra.mrb[0].mxu0 %v499
      %v698 = vpop.f32.mrb[0].mxu0
      %v699 = vadd.f32 %v438, %v698
      %v700 = vpop.f32.mrb[0].mxu0
      %701 = vmatprep.mubr.f32.mxu0 0.0
      %702 = vmatmul.mubr.f32.gmra.mrb[0].mxu0 %v502
      %v703 = vpop.f32.mrb[0].mxu0
      %v704 = vadd.f32 %v438, %v703
      %v705 = vpop.f32.mrb[0].mxu0
      %706 = vmatprep.mubr.f32.mxu0 0.0
      %707 = vmatmul.mubr.f32.gmra.mrb[0].mxu0 %v505
      %v708 = vpop.f32.mrb[0].mxu0
      %v709 = vadd.f32 %v438, %v708
      %v710 = vpop.f32.mrb[0].mxu0
      %711 = vmatprep.mubr.f32.mxu0 0.0
      %712 = vmatmul.mubr.f32.gmra.mrb[0].mxu0 %v508
      %v713 = vpop.f32.mrb[0].mxu0
      %v714 = vadd.f32 %v438, %v713
      %v715 = vpop.f32.mrb[0].mxu0
      %716 = vmatprep.mubr.f32.mxu0 0.0
      %717 = vmatmul.mubr.f32.gmra.mrb[0].mxu0 %v511
      %v718 = vpop.f32.mrb[0].mxu0
      %v719 = vadd.f32 %v438, %v718
      %v720 = vpop.f32.mrb[0].mxu0
      %721 = vmatprep.mubr.f32.mxu0 0.0
      %722 = vmatmul.mubr.f32.gmra.mrb[0].mxu0 %v514
      %v723 = vpop.f32.mrb[0].mxu0
      %v724 = vadd.f32 %v438, %v723
      %v725 = vpop.f32.mrb[0].mxu0
      %726 = vmatprep.mubr.f32.mxu0 0.0
      %727 = vmatmul.mubr.f32.gmra.mrb[0].mxu0 %v517
      %v728 = vpop.f32.mrb[0].mxu0
      %v729 = vadd.f32 %v438, %v728
      %v730 = vpop.f32.mrb[0].mxu0
      %731 = vmatprep.mubr.f32.mxu0 0.0
      %732 = vmatmul.mubr.f32.gmra.mrb[0].mxu0 %v520
      %v733 = vpop.f32.mrb[0].mxu0
      %v734 = vadd.f32 %v438, %v733
      %v735 = vpop.f32.mrb[0].mxu0
      %736 = vmatprep.mubr.f32.mxu0 0.0
      %737 = vmatmul.mubr.f32.gmra.mrb[0].mxu0 %v523
      %v738 = vpop.f32.mrb[0].mxu0
      %v739 = vadd.f32 %v438, %v738
      %v740 = vpop.f32.mrb[0].mxu0
      %741 = vmatprep.mubr.f32.mxu0 0.0
      %742 = vmatmul.mubr.f32.gmra.mrb[0].mxu0 %v526
      %v743 = vpop.f32.mrb[0].mxu0
      %v744 = vadd.f32 %v438, %v743
      %v745 = vpop.f32.mrb[0].mxu0
      %746 = vmatprep.mubr.f32.mxu0 0.0
      %747 = vmatmul.mubr.f32.gmra.mrb[0].mxu0 %v529
      %v748 = vpop.f32.mrb[0].mxu0
      %v749 = vadd.f32 %v438, %v748
      %v750 = vpop.f32.mrb[0].mxu0
      %751 = vmatprep.mubr.f32.mxu0 0.0
      %752 = vmatmul.mubr.f32.gmra.mrb[0].mxu0 %v532
      %v753 = vpop.f32.mrb[0].mxu0
      %v754 = vadd.f32 %v438, %v753
      %v755 = vpop.f32.mrb[0].mxu0
      %756 = vmatprep.mubr.f32.mxu0 0.0
      %757 = vmatmul.mubr.f32.gmra.mrb[0].mxu0 %v535
      %v758 = vpop.f32.mrb[0].mxu0
      %v759 = vadd.f32 %v438, %v758
      %v760 = vpop.f32.mrb[0].mxu0
      %761 = vdwg.mxu0
      %v762 = vtanh.pop %v604
      %v763 = vtanh.pop %v609
      %v764 = vtanh.pop %v614
      %v765 = vtanh.pop %v619
      %v766 = vtanh.pop %v624
      %v767 = vtanh.pop %v629
      %v768 = vtanh.pop %v634
      %v769 = vtanh.pop %v639
      %v770 = vtanh.pop %v644
      %v771 = vtanh.pop %v649
      %v772 = vtanh.pop %v654
      %v773 = vtanh.pop %v659
      %v774 = vtanh.pop %v664
      %v775 = vtanh.pop %v669
      %v776 = vtanh.pop %v674
      %v777 = vtanh.pop %v679
      %v778 = vtanh.pop %v684
      %v779 = vtanh.pop %v689
      %v780 = vtanh.pop %v694
      %v781 = vtanh.pop %v699
      %v782 = vtanh.pop %v704
      %v783 = vtanh.pop %v709
      %v784 = vtanh.pop %v714
      %v785 = vtanh.pop %v719
      %v786 = vtanh.pop %v724
      %v787 = vtanh.pop %v729
      %v788 = vtanh.pop %v734
      %v789 = vtanh.pop %v739
      %v790 = vtanh.pop %v744
      %v791 = vtanh.pop %v749
      %v792 = vtanh.pop %v754
      %v793 = vtanh.pop %v759
      %v794 = vld [vmem:[%s4] sm:$0xff]
      %v795 = vld [vmem:[%s4 + $0x8] sm:$0xff]
      %v796 = vld [vmem:[%s4 + $0x10] sm:$0xff]
      %v797 = vld [vmem:[%s4 + $0x18] sm:$0xff]
      %v798 = vld [vmem:[%s5] sm:$0x1]
      %v800 = vlaneseq
      %v801 = vshrl.u32 %v800, 7
      %v802 = vsub.s32 0, %v801
      %v803 = vrot.slane %v798, %v802
      %vm805 = vcmask 261120
      %v807 = vsel %vm805, %v762, 0
      %v810 = vsel %vm805, %v763, 0
      %v813 = vsel %vm805, %v764, 0
      %v816 = vsel %vm805, %v765, 0
      %v819 = vsel %vm805, %v766, 0
      %v822 = vsel %vm805, %v767, 0
      %v825 = vsel %vm805, %v768, 0
      %v828 = vsel %vm805, %v769, 0
      %v831 = vsel %vm805, %v770, 0
      %v834 = vsel %vm805, %v771, 0
      %v837 = vsel %vm805, %v772, 0
      %v840 = vsel %vm805, %v773, 0
      %v843 = vsel %vm805, %v774, 0
      %v846 = vsel %vm805, %v775, 0
      %v849 = vsel %vm805, %v776, 0
      %v852 = vsel %vm805, %v777, 0
      %v855 = vsel %vm805, %v778, 0
      %v858 = vsel %vm805, %v779, 0
      %v861 = vsel %vm805, %v780, 0
      %v864 = vsel %vm805, %v781, 0
      %v867 = vsel %vm805, %v782, 0
      %v870 = vsel %vm805, %v783, 0
      %v873 = vsel %vm805, %v784, 0
      %v876 = vsel %vm805, %v785, 0
      %v879 = vsel %vm805, %v786, 0
      %v882 = vsel %vm805, %v787, 0
      %v885 = vsel %vm805, %v788, 0
      %v888 = vsel %vm805, %v789, 0
      %v891 = vsel %vm805, %v790, 0
      %v894 = vsel %vm805, %v791, 0
      %v897 = vsel %vm805, %v792, 0
      %v900 = vsel %vm805, %v793, 0
      %902 = vmatprep.subr.mxu0 0.0
      %903 = vmatpush1.msra.mxu0 %v794
      %904 = vmatprep.subr.mxu0 0.0
      %905 = vmatpush1.msra.mxu0 %v795
      %906 = vmatprep.subr.mxu0 0.0
      %907 = vmatpush1.msra.mxu0 %v796
      %908 = vmatprep.subr.mxu0 0.0
      %909 = vmatpush1.msra.mxu0 %v797
      %910 = vmatprep.subr.mxu0 0.0
      %911 = vmatpush1.msra.mxu0 0.0
      %912 = vmatprep.subr.mxu0 0.0
      %913 = vmatpush1.msra.mxu0 0.0
      %914 = vmatprep.subr.mxu0 0.0
      %915 = vmatpush1.msra.mxu0 0.0
      %916 = vmatprep.subr.mxu0 0.0
      %917 = vmatpush1.msra.mxu0 0.0
      %918 = vmatprep.subr.mxu0 0.0
      %919 = vmatpush1.msra.mxu0 0.0
      %920 = vmatprep.subr.mxu0 0.0
      %921 = vmatpush1.msra.mxu0 0.0
      %922 = vmatprep.subr.mxu0 0.0
      %923 = vmatpush1.msra.mxu0 0.0
      %924 = vmatprep.subr.mxu0 0.0
      %925 = vmatpush1.msra.mxu0 0.0
      %926 = vmatprep.subr.mxu0 0.0
      %927 = vmatpush1.msra.mxu0 0.0
      %928 = vmatprep.subr.mxu0 0.0
      %929 = vmatpush1.msra.mxu0 0.0
      %930 = vmatprep.subr.mxu0 0.0
      %931 = vmatpush1.msra.mxu0 0.0
      %932 = vmatprep.subr.mxu0 0.0
      %933 = vmatpush1.msra.mxu0 0.0
      %934 = vmatprep.subr.mxu0 0.0
      %935 = vmatpush1.msra.mxu0 0.0
      %936 = vmatprep.subr.mxu0 0.0
      %937 = vmatpush1.msra.mxu0 0.0
      %938 = vmatprep.subr.mxu0 0.0
      %939 = vmatpush1.msra.mxu0 0.0
      %940 = vmatprep.subr.mxu0 0.0
      %941 = vmatpush1.msra.mxu0 0.0
      %942 = vmatprep.subr.mxu0 0.0
      %943 = vmatpush1.msra.mxu0 0.0
      %944 = vmatprep.subr.mxu0 0.0
      %945 = vmatpush1.msra.mxu0 0.0
      %946 = vmatprep.subr.mxu0 0.0
      %947 = vmatpush1.msra.mxu0 0.0
      %948 = vmatprep.subr.mxu0 0.0
      %949 = vmatpush1.msra.mxu0 0.0
      %950 = vmatprep.subr.mxu0 0.0
      %951 = vmatpush1.msra.mxu0 0.0
      %952 = vmatprep.subr.mxu0 0.0
      %953 = vmatpush1.msra.mxu0 0.0
      %954 = vmatprep.subr.mxu0 0.0
      %955 = vmatpush1.msra.mxu0 0.0
      %956 = vmatprep.subr.mxu0 0.0
      %957 = vmatpush1.msra.mxu0 0.0
      %958 = vmatprep.subr.mxu0 0.0
      %959 = vmatpush1.msra.mxu0 0.0
      %960 = vmatprep.subr.mxu0 0.0
      %961 = vmatpush1.msra.mxu0 0.0
      %962 = vmatprep.subr.mxu0 0.0
      %963 = vmatpush1.msra.mxu0 0.0
      %964 = vmatprep.subr.mxu0 0.0
      %965 = vmatpush1.msra.mxu0 0.0
      %966 = vmatprep.mubr.f32.mxu0 0.0
      %967 = vmatmul.mubr.f32.gmra.mrb[0].mxu0 %v807
      %v968 = vpop.f32.mrb[0].mxu0
      %v969 = vadd.f32 %v803, %v968
      %v970 = vpop.f32.mrb[0].mxu0
      %971 = vmatprep.mubr.f32.mxu0 0.0
      %972 = vmatmul.mubr.f32.gmra.mrb[0].mxu0 %v810
      %v973 = vpop.f32.mrb[0].mxu0
      %v974 = vadd.f32 %v803, %v973
      %v975 = vpop.f32.mrb[0].mxu0
      %976 = vmatprep.mubr.f32.mxu0 0.0
      %977 = vmatmul.mubr.f32.gmra.mrb[0].mxu0 %v813
      %v978 = vpop.f32.mrb[0].mxu0
      %v979 = vadd.f32 %v803, %v978
      %v980 = vpop.f32.mrb[0].mxu0
      %981 = vmatprep.mubr.f32.mxu0 0.0
      %982 = vmatmul.mubr.f32.gmra.mrb[0].mxu0 %v816
      %v983 = vpop.f32.mrb[0].mxu0
      %v984 = vadd.f32 %v803, %v983
      %v985 = vpop.f32.mrb[0].mxu0
      %986 = vmatprep.mubr.f32.mxu0 0.0
      %987 = vmatmul.mubr.f32.gmra.mrb[0].mxu0 %v819
      %v988 = vpop.f32.mrb[0].mxu0
      %v989 = vadd.f32 %v803, %v988
      %v990 = vpop.f32.mrb[0].mxu0
      %991 = vmatprep.mubr.f32.mxu0 0.0
      %992 = vmatmul.mubr.f32.gmra.mrb[0].mxu0 %v822
      %v993 = vpop.f32.mrb[0].mxu0
      %v994 = vadd.f32 %v803, %v993
      %v995 = vpop.f32.mrb[0].mxu0
      %996 = vmatprep.mubr.f32.mxu0 0.0
      %997 = vmatmul.mubr.f32.gmra.mrb[0].mxu0 %v825
      %v998 = vpop.f32.mrb[0].mxu0
      %v999 = vadd.f32 %v803, %v998
      %v1000 = vpop.f32.mrb[0].mxu0
      %1001 = vmatprep.mubr.f32.mxu0 0.0
      %1002 = vmatmul.mubr.f32.gmra.mrb[0].mxu0 %v828
      %v1003 = vpop.f32.mrb[0].mxu0
      %v1004 = vadd.f32 %v803, %v1003
      %v1005 = vpop.f32.mrb[0].mxu0
      %1006 = vmatprep.mubr.f32.mxu0 0.0
      %1007 = vmatmul.mubr.f32.gmra.mrb[0].mxu0 %v831
      %v1008 = vpop.f32.mrb[0].mxu0
      %v1009 = vadd.f32 %v803, %v1008
      %v1010 = vpop.f32.mrb[0].mxu0
      %1011 = vmatprep.mubr.f32.mxu0 0.0
      %1012 = vmatmul.mubr.f32.gmra.mrb[0].mxu0 %v834
      %v1013 = vpop.f32.mrb[0].mxu0
      %v1014 = vadd.f32 %v803, %v1013
      %v1015 = vpop.f32.mrb[0].mxu0
      %1016 = vmatprep.mubr.f32.mxu0 0.0
      %1017 = vmatmul.mubr.f32.gmra.mrb[0].mxu0 %v837
      %v1018 = vpop.f32.mrb[0].mxu0
      %v1019 = vadd.f32 %v803, %v1018
      %v1020 = vpop.f32.mrb[0].mxu0
      %1021 = vmatprep.mubr.f32.mxu0 0.0
      %1022 = vmatmul.mubr.f32.gmra.mrb[0].mxu0 %v840
      %v1023 = vpop.f32.mrb[0].mxu0
      %v1024 = vadd.f32 %v803, %v1023
      %v1025 = vpop.f32.mrb[0].mxu0
      %1026 = vmatprep.mubr.f32.mxu0 0.0
      %1027 = vmatmul.mubr.f32.gmra.mrb[0].mxu0 %v843
      %v1028 = vpop.f32.mrb[0].mxu0
      %v1029 = vadd.f32 %v803, %v1028
      %v1030 = vpop.f32.mrb[0].mxu0
      %1031 = vmatprep.mubr.f32.mxu0 0.0
      %1032 = vmatmul.mubr.f32.gmra.mrb[0].mxu0 %v846
      %v1033 = vpop.f32.mrb[0].mxu0
      %v1034 = vadd.f32 %v803, %v1033
      %v1035 = vpop.f32.mrb[0].mxu0
      %1036 = vmatprep.mubr.f32.mxu0 0.0
      %1037 = vmatmul.mubr.f32.gmra.mrb[0].mxu0 %v849
      %v1038 = vpop.f32.mrb[0].mxu0
      %v1039 = vadd.f32 %v803, %v1038
      %v1040 = vpop.f32.mrb[0].mxu0
      %1041 = vmatprep.mubr.f32.mxu0 0.0
      %1042 = vmatmul.mubr.f32.gmra.mrb[0].mxu0 %v852
      %v1043 = vpop.f32.mrb[0].mxu0
      %v1044 = vadd.f32 %v803, %v1043
      %v1045 = vpop.f32.mrb[0].mxu0
      %1046 = vmatprep.mubr.f32.mxu0 0.0
      %1047 = vmatmul.mubr.f32.gmra.mrb[0].mxu0 %v855
      %v1048 = vpop.f32.mrb[0].mxu0
      %v1049 = vadd.f32 %v803, %v1048
      %v1050 = vpop.f32.mrb[0].mxu0
      %1051 = vmatprep.mubr.f32.mxu0 0.0
      %1052 = vmatmul.mubr.f32.gmra.mrb[0].mxu0 %v858
      %v1053 = vpop.f32.mrb[0].mxu0
      %v1054 = vadd.f32 %v803, %v1053
      %v1055 = vpop.f32.mrb[0].mxu0
      %1056 = vmatprep.mubr.f32.mxu0 0.0
      %1057 = vmatmul.mubr.f32.gmra.mrb[0].mxu0 %v861
      %v1058 = vpop.f32.mrb[0].mxu0
      %v1059 = vadd.f32 %v803, %v1058
      %v1060 = vpop.f32.mrb[0].mxu0
      %1061 = vmatprep.mubr.f32.mxu0 0.0
      %1062 = vmatmul.mubr.f32.gmra.mrb[0].mxu0 %v864
      %v1063 = vpop.f32.mrb[0].mxu0
      %v1064 = vadd.f32 %v803, %v1063
      %v1065 = vpop.f32.mrb[0].mxu0
      %1066 = vmatprep.mubr.f32.mxu0 0.0
      %1067 = vmatmul.mubr.f32.gmra.mrb[0].mxu0 %v867
      %v1068 = vpop.f32.mrb[0].mxu0
      %v1069 = vadd.f32 %v803, %v1068
      %v1070 = vpop.f32.mrb[0].mxu0
      %1071 = vmatprep.mubr.f32.mxu0 0.0
      %1072 = vmatmul.mubr.f32.gmra.mrb[0].mxu0 %v870
      %v1073 = vpop.f32.mrb[0].mxu0
      %v1074 = vadd.f32 %v803, %v1073
      %v1075 = vpop.f32.mrb[0].mxu0
      %1076 = vmatprep.mubr.f32.mxu0 0.0
      %1077 = vmatmul.mubr.f32.gmra.mrb[0].mxu0 %v873
      %v1078 = vpop.f32.mrb[0].mxu0
      %v1079 = vadd.f32 %v803, %v1078
      %v1080 = vpop.f32.mrb[0].mxu0
      %1081 = vmatprep.mubr.f32.mxu0 0.0
      %1082 = vmatmul.mubr.f32.gmra.mrb[0].mxu0 %v876
      %v1083 = vpop.f32.mrb[0].mxu0
      %v1084 = vadd.f32 %v803, %v1083
      %v1085 = vpop.f32.mrb[0].mxu0
      %1086 = vmatprep.mubr.f32.mxu0 0.0
      %1087 = vmatmul.mubr.f32.gmra.mrb[0].mxu0 %v879
      %v1088 = vpop.f32.mrb[0].mxu0
      %v1089 = vadd.f32 %v803, %v1088
      %v1090 = vpop.f32.mrb[0].mxu0
      %1091 = vmatprep.mubr.f32.mxu0 0.0
      %1092 = vmatmul.mubr.f32.gmra.mrb[0].mxu0 %v882
      %v1093 = vpop.f32.mrb[0].mxu0
      %v1094 = vadd.f32 %v803, %v1093
      %v1095 = vpop.f32.mrb[0].mxu0
      %1096 = vmatprep.mubr.f32.mxu0 0.0
      %1097 = vmatmul.mubr.f32.gmra.mrb[0].mxu0 %v885
      %v1098 = vpop.f32.mrb[0].mxu0
      %v1099 = vadd.f32 %v803, %v1098
      %v1100 = vpop.f32.mrb[0].mxu0
      %1101 = vmatprep.mubr.f32.mxu0 0.0
      %1102 = vmatmul.mubr.f32.gmra.mrb[0].mxu0 %v888
      %v1103 = vpop.f32.mrb[0].mxu0
      %v1104 = vadd.f32 %v803, %v1103
      %v1105 = vpop.f32.mrb[0].mxu0
      %1106 = vmatprep.mubr.f32.mxu0 0.0
      %1107 = vmatmul.mubr.f32.gmra.mrb[0].mxu0 %v891
      %v1108 = vpop.f32.mrb[0].mxu0
      %v1109 = vadd.f32 %v803, %v1108
      %v1110 = vpop.f32.mrb[0].mxu0
      %1111 = vmatprep.mubr.f32.mxu0 0.0
      %1112 = vmatmul.mubr.f32.gmra.mrb[0].mxu0 %v894
      %v1113 = vpop.f32.mrb[0].mxu0
      %v1114 = vadd.f32 %v803, %v1113
      %v1115 = vpop.f32.mrb[0].mxu0
      %1116 = vmatprep.mubr.f32.mxu0 0.0
      %1117 = vmatmul.mubr.f32.gmra.mrb[0].mxu0 %v897
      %v1118 = vpop.f32.mrb[0].mxu0
      %v1119 = vadd.f32 %v803, %v1118
      %v1120 = vpop.f32.mrb[0].mxu0
      %1121 = vmatprep.mubr.f32.mxu0 0.0
      %1122 = vmatmul.mubr.f32.gmra.mrb[0].mxu0 %v900
      %v1123 = vpop.f32.mrb[0].mxu0
      %v1124 = vadd.f32 %v803, %v1123
      %v1125 = vpop.f32.mrb[0].mxu0
      %1126 = vdwg.mxu0
      %v1127 = vtanh.pop %v969
      %v1128 = vtanh.pop %v974
      %v1129 = vtanh.pop %v979
      %v1130 = vtanh.pop %v984
      %v1131 = vtanh.pop %v989
      %v1132 = vtanh.pop %v994
      %v1133 = vtanh.pop %v999
      %v1134 = vtanh.pop %v1004
      %v1135 = vtanh.pop %v1009
      %v1136 = vtanh.pop %v1014
      %v1137 = vtanh.pop %v1019
      %v1138 = vtanh.pop %v1024
      %v1139 = vtanh.pop %v1029
      %v1140 = vtanh.pop %v1034
      %v1141 = vtanh.pop %v1039
      %v1142 = vtanh.pop %v1044
      %v1143 = vtanh.pop %v1049
      %v1144 = vtanh.pop %v1054
      %v1145 = vtanh.pop %v1059
      %v1146 = vtanh.pop %v1064
      %v1147 = vtanh.pop %v1069
      %v1148 = vtanh.pop %v1074
      %v1149 = vtanh.pop %v1079
      %v1150 = vtanh.pop %v1084
      %v1151 = vtanh.pop %v1089
      %v1152 = vtanh.pop %v1094
      %v1153 = vtanh.pop %v1099
      %v1154 = vtanh.pop %v1104
      %v1155 = vtanh.pop %v1109
      %v1156 = vtanh.pop %v1114
      %v1157 = vtanh.pop %v1119
      %v1158 = vtanh.pop %v1124
      %v1159 = vld [vmem:[%s6] sm:$0xff]
      %v1160 = vld [vmem:[%s6 + $0x8] sm:$0xff]
      %v1161 = vld [vmem:[%s6 + $0x10] sm:$0xff]
      %v1162 = vld [vmem:[%s6 + $0x18] sm:$0xff]
      %v1163 = vld [vmem:[%s7] sm:$0x1]
      %v1165 = vlaneseq
      %v1166 = vshrl.u32 %v1165, 7
      %v1167 = vsub.s32 0, %v1166
      %v1168 = vrot.slane %v1163, %v1167
      %v1171 = vsel %vm805, %v1127, 0
      %v1174 = vsel %vm805, %v1128, 0
      %v1177 = vsel %vm805, %v1129, 0
      %v1180 = vsel %vm805, %v1130, 0
      %v1183 = vsel %vm805, %v1131, 0
      %v1186 = vsel %vm805, %v1132, 0
      %v1189 = vsel %vm805, %v1133, 0
      %v1192 = vsel %vm805, %v1134, 0
      %v1195 = vsel %vm805, %v1135, 0
      %v1198 = vsel %vm805, %v1136, 0
      %v1201 = vsel %vm805, %v1137, 0
      %v1204 = vsel %vm805, %v1138, 0
      %v1207 = vsel %vm805, %v1139, 0
      %v1210 = vsel %vm805, %v1140, 0
      %v1213 = vsel %vm805, %v1141, 0
      %v1216 = vsel %vm805, %v1142, 0
      %v1219 = vsel %vm805, %v1143, 0
      %v1222 = vsel %vm805, %v1144, 0
      %v1225 = vsel %vm805, %v1145, 0
      %v1228 = vsel %vm805, %v1146, 0
      %v1231 = vsel %vm805, %v1147, 0
      %v1234 = vsel %vm805, %v1148, 0
      %v1237 = vsel %vm805, %v1149, 0
      %v1240 = vsel %vm805, %v1150, 0
      %v1243 = vsel %vm805, %v1151, 0
      %v1246 = vsel %vm805, %v1152, 0
      %v1249 = vsel %vm805, %v1153, 0
      %v1252 = vsel %vm805, %v1154, 0
      %v1255 = vsel %vm805, %v1155, 0
      %v1258 = vsel %vm805, %v1156, 0
      %v1261 = vsel %vm805, %v1157, 0
      %v1264 = vsel %vm805, %v1158, 0
      %1266 = vmatprep.subr.mxu0 0.0
      %1267 = vmatpush1.msra.mxu0 %v1159
      %1268 = vmatprep.subr.mxu0 0.0
      %1269 = vmatpush1.msra.mxu0 %v1160
      %1270 = vmatprep.subr.mxu0 0.0
      %1271 = vmatpush1.msra.mxu0 %v1161
      %1272 = vmatprep.subr.mxu0 0.0
      %1273 = vmatpush1.msra.mxu0 %v1162
      %1274 = vmatprep.subr.mxu0 0.0
      %1275 = vmatpush1.msra.mxu0 0.0
      %1276 = vmatprep.subr.mxu0 0.0
      %1277 = vmatpush1.msra.mxu0 0.0
      %1278 = vmatprep.subr.mxu0 0.0
      %1279 = vmatpush1.msra.mxu0 0.0
      %1280 = vmatprep.subr.mxu0 0.0
      %1281 = vmatpush1.msra.mxu0 0.0
      %1282 = vmatprep.subr.mxu0 0.0
      %1283 = vmatpush1.msra.mxu0 0.0
      %1284 = vmatprep.subr.mxu0 0.0
      %1285 = vmatpush1.msra.mxu0 0.0
      %1286 = vmatprep.subr.mxu0 0.0
      %1287 = vmatpush1.msra.mxu0 0.0
      %1288 = vmatprep.subr.mxu0 0.0
      %1289 = vmatpush1.msra.mxu0 0.0
      %1290 = vmatprep.subr.mxu0 0.0
      %1291 = vmatpush1.msra.mxu0 0.0
      %1292 = vmatprep.subr.mxu0 0.0
      %1293 = vmatpush1.msra.mxu0 0.0
      %1294 = vmatprep.subr.mxu0 0.0
      %1295 = vmatpush1.msra.mxu0 0.0
      %1296 = vmatprep.subr.mxu0 0.0
      %1297 = vmatpush1.msra.mxu0 0.0
      %1298 = vmatprep.subr.mxu0 0.0
      %1299 = vmatpush1.msra.mxu0 0.0
      %1300 = vmatprep.subr.mxu0 0.0
      %1301 = vmatpush1.msra.mxu0 0.0
      %1302 = vmatprep.subr.mxu0 0.0
      %1303 = vmatpush1.msra.mxu0 0.0
      %1304 = vmatprep.subr.mxu0 0.0
      %1305 = vmatpush1.msra.mxu0 0.0
      %1306 = vmatprep.subr.mxu0 0.0
      %1307 = vmatpush1.msra.mxu0 0.0
      %1308 = vmatprep.subr.mxu0 0.0
      %1309 = vmatpush1.msra.mxu0 0.0
      %1310 = vmatprep.subr.mxu0 0.0
      %1311 = vmatpush1.msra.mxu0 0.0
      %1312 = vmatprep.subr.mxu0 0.0
      %1313 = vmatpush1.msra.mxu0 0.0
      %1314 = vmatprep.subr.mxu0 0.0
      %1315 = vmatpush1.msra.mxu0 0.0
      %1316 = vmatprep.subr.mxu0 0.0
      %1317 = vmatpush1.msra.mxu0 0.0
      %1318 = vmatprep.subr.mxu0 0.0
      %1319 = vmatpush1.msra.mxu0 0.0
      %1320 = vmatprep.subr.mxu0 0.0
      %1321 = vmatpush1.msra.mxu0 0.0
      %1322 = vmatprep.subr.mxu0 0.0
      %1323 = vmatpush1.msra.mxu0 0.0
      %1324 = vmatprep.subr.mxu0 0.0
      %1325 = vmatpush1.msra.mxu0 0.0
      %1326 = vmatprep.subr.mxu0 0.0
      %1327 = vmatpush1.msra.mxu0 0.0
      %1328 = vmatprep.subr.mxu0 0.0
      %1329 = vmatpush1.msra.mxu0 0.0
      %1330 = vmatprep.mubr.f32.mxu0 0.0
      %1331 = vmatmul.mubr.f32.gmra.mrb[0].mxu0 %v1171
      %v1332 = vpop.f32.mrb[0].mxu0
      %v1333 = vadd.f32 %v1168, %v1332
      %v1334 = vpop.f32.mrb[0].mxu0
      %1335 = vmatprep.mubr.f32.mxu0 0.0
      %1336 = vmatmul.mubr.f32.gmra.mrb[0].mxu0 %v1174
      %v1337 = vpop.f32.mrb[0].mxu0
      %v1338 = vadd.f32 %v1168, %v1337
      %v1339 = vpop.f32.mrb[0].mxu0
      %1340 = vmatprep.mubr.f32.mxu0 0.0
      %1341 = vmatmul.mubr.f32.gmra.mrb[0].mxu0 %v1177
      %v1342 = vpop.f32.mrb[0].mxu0
      %v1343 = vadd.f32 %v1168, %v1342
      %v1344 = vpop.f32.mrb[0].mxu0
      %1345 = vmatprep.mubr.f32.mxu0 0.0
      %1346 = vmatmul.mubr.f32.gmra.mrb[0].mxu0 %v1180
      %v1347 = vpop.f32.mrb[0].mxu0
      %v1348 = vadd.f32 %v1168, %v1347
      %v1349 = vpop.f32.mrb[0].mxu0
      %1350 = vmatprep.mubr.f32.mxu0 0.0
      %1351 = vmatmul.mubr.f32.gmra.mrb[0].mxu0 %v1183
      %v1352 = vpop.f32.mrb[0].mxu0
      %v1353 = vadd.f32 %v1168, %v1352
      %v1354 = vpop.f32.mrb[0].mxu0
      %1355 = vmatprep.mubr.f32.mxu0 0.0
      %1356 = vmatmul.mubr.f32.gmra.mrb[0].mxu0 %v1186
      %v1357 = vpop.f32.mrb[0].mxu0
      %v1358 = vadd.f32 %v1168, %v1357
      %v1359 = vpop.f32.mrb[0].mxu0
      %1360 = vmatprep.mubr.f32.mxu0 0.0
      %1361 = vmatmul.mubr.f32.gmra.mrb[0].mxu0 %v1189
      %v1362 = vpop.f32.mrb[0].mxu0
      %v1363 = vadd.f32 %v1168, %v1362
      %v1364 = vpop.f32.mrb[0].mxu0
      %1365 = vmatprep.mubr.f32.mxu0 0.0
      %1366 = vmatmul.mubr.f32.gmra.mrb[0].mxu0 %v1192
      %v1367 = vpop.f32.mrb[0].mxu0
      %v1368 = vadd.f32 %v1168, %v1367
      %v1369 = vpop.f32.mrb[0].mxu0
      %1370 = vmatprep.mubr.f32.mxu0 0.0
      %1371 = vmatmul.mubr.f32.gmra.mrb[0].mxu0 %v1195
      %v1372 = vpop.f32.mrb[0].mxu0
      %v1373 = vadd.f32 %v1168, %v1372
      %v1374 = vpop.f32.mrb[0].mxu0
      %1375 = vmatprep.mubr.f32.mxu0 0.0
      %1376 = vmatmul.mubr.f32.gmra.mrb[0].mxu0 %v1198
      %v1377 = vpop.f32.mrb[0].mxu0
      %v1378 = vadd.f32 %v1168, %v1377
      %v1379 = vpop.f32.mrb[0].mxu0
      %1380 = vmatprep.mubr.f32.mxu0 0.0
      %1381 = vmatmul.mubr.f32.gmra.mrb[0].mxu0 %v1201
      %v1382 = vpop.f32.mrb[0].mxu0
      %v1383 = vadd.f32 %v1168, %v1382
      %v1384 = vpop.f32.mrb[0].mxu0
      %1385 = vmatprep.mubr.f32.mxu0 0.0
      %1386 = vmatmul.mubr.f32.gmra.mrb[0].mxu0 %v1204
      %v1387 = vpop.f32.mrb[0].mxu0
      %v1388 = vadd.f32 %v1168, %v1387
      %v1389 = vpop.f32.mrb[0].mxu0
      %1390 = vmatprep.mubr.f32.mxu0 0.0
      %1391 = vmatmul.mubr.f32.gmra.mrb[0].mxu0 %v1207
      %v1392 = vpop.f32.mrb[0].mxu0
      %v1393 = vadd.f32 %v1168, %v1392
      %v1394 = vpop.f32.mrb[0].mxu0
      %1395 = vmatprep.mubr.f32.mxu0 0.0
      %1396 = vmatmul.mubr.f32.gmra.mrb[0].mxu0 %v1210
      %v1397 = vpop.f32.mrb[0].mxu0
      %v1398 = vadd.f32 %v1168, %v1397
      %v1399 = vpop.f32.mrb[0].mxu0
      %1400 = vmatprep.mubr.f32.mxu0 0.0
      %1401 = vmatmul.mubr.f32.gmra.mrb[0].mxu0 %v1213
      %v1402 = vpop.f32.mrb[0].mxu0
      %v1403 = vadd.f32 %v1168, %v1402
      %v1404 = vpop.f32.mrb[0].mxu0
      %1405 = vmatprep.mubr.f32.mxu0 0.0
      %1406 = vmatmul.mubr.f32.gmra.mrb[0].mxu0 %v1216
      %v1407 = vpop.f32.mrb[0].mxu0
      %v1408 = vadd.f32 %v1168, %v1407
      %v1409 = vpop.f32.mrb[0].mxu0
      %1410 = vmatprep.mubr.f32.mxu0 0.0
      %1411 = vmatmul.mubr.f32.gmra.mrb[0].mxu0 %v1219
      %v1412 = vpop.f32.mrb[0].mxu0
      %v1413 = vadd.f32 %v1168, %v1412
      %v1414 = vpop.f32.mrb[0].mxu0
      %1415 = vmatprep.mubr.f32.mxu0 0.0
      %1416 = vmatmul.mubr.f32.gmra.mrb[0].mxu0 %v1222
      %v1417 = vpop.f32.mrb[0].mxu0
      %v1418 = vadd.f32 %v1168, %v1417
      %v1419 = vpop.f32.mrb[0].mxu0
      %1420 = vmatprep.mubr.f32.mxu0 0.0
      %1421 = vmatmul.mubr.f32.gmra.mrb[0].mxu0 %v1225
      %v1422 = vpop.f32.mrb[0].mxu0
      %v1423 = vadd.f32 %v1168, %v1422
      %v1424 = vpop.f32.mrb[0].mxu0
      %1425 = vmatprep.mubr.f32.mxu0 0.0
      %1426 = vmatmul.mubr.f32.gmra.mrb[0].mxu0 %v1228
      %v1427 = vpop.f32.mrb[0].mxu0
      %v1428 = vadd.f32 %v1168, %v1427
      %v1429 = vpop.f32.mrb[0].mxu0
      %1430 = vmatprep.mubr.f32.mxu0 0.0
      %1431 = vmatmul.mubr.f32.gmra.mrb[0].mxu0 %v1231
      %v1432 = vpop.f32.mrb[0].mxu0
      %v1433 = vadd.f32 %v1168, %v1432
      %v1434 = vpop.f32.mrb[0].mxu0
      %1435 = vmatprep.mubr.f32.mxu0 0.0
      %1436 = vmatmul.mubr.f32.gmra.mrb[0].mxu0 %v1234
      %v1437 = vpop.f32.mrb[0].mxu0
      %v1438 = vadd.f32 %v1168, %v1437
      %v1439 = vpop.f32.mrb[0].mxu0
      %1440 = vmatprep.mubr.f32.mxu0 0.0
      %1441 = vmatmul.mubr.f32.gmra.mrb[0].mxu0 %v1237
      %v1442 = vpop.f32.mrb[0].mxu0
      %v1443 = vadd.f32 %v1168, %v1442
      %v1444 = vpop.f32.mrb[0].mxu0
      %1445 = vmatprep.mubr.f32.mxu0 0.0
      %1446 = vmatmul.mubr.f32.gmra.mrb[0].mxu0 %v1240
      %v1447 = vpop.f32.mrb[0].mxu0
      %v1448 = vadd.f32 %v1168, %v1447
      %v1449 = vpop.f32.mrb[0].mxu0
      %1450 = vmatprep.mubr.f32.mxu0 0.0
      %1451 = vmatmul.mubr.f32.gmra.mrb[0].mxu0 %v1243
      %v1452 = vpop.f32.mrb[0].mxu0
      %v1453 = vadd.f32 %v1168, %v1452
      %v1454 = vpop.f32.mrb[0].mxu0
      %1455 = vmatprep.mubr.f32.mxu0 0.0
      %1456 = vmatmul.mubr.f32.gmra.mrb[0].mxu0 %v1246
      %v1457 = vpop.f32.mrb[0].mxu0
      %v1458 = vadd.f32 %v1168, %v1457
      %v1459 = vpop.f32.mrb[0].mxu0
      %1460 = vmatprep.mubr.f32.mxu0 0.0
      %1461 = vmatmul.mubr.f32.gmra.mrb[0].mxu0 %v1249
      %v1462 = vpop.f32.mrb[0].mxu0
      %v1463 = vadd.f32 %v1168, %v1462
      %v1464 = vpop.f32.mrb[0].mxu0
      %1465 = vmatprep.mubr.f32.mxu0 0.0
      %1466 = vmatmul.mubr.f32.gmra.mrb[0].mxu0 %v1252
      %v1467 = vpop.f32.mrb[0].mxu0
      %v1468 = vadd.f32 %v1168, %v1467
      %v1469 = vpop.f32.mrb[0].mxu0
      %1470 = vmatprep.mubr.f32.mxu0 0.0
      %1471 = vmatmul.mubr.f32.gmra.mrb[0].mxu0 %v1255
      %v1472 = vpop.f32.mrb[0].mxu0
      %v1473 = vadd.f32 %v1168, %v1472
      %v1474 = vpop.f32.mrb[0].mxu0
      %1475 = vmatprep.mubr.f32.mxu0 0.0
      %1476 = vmatmul.mubr.f32.gmra.mrb[0].mxu0 %v1258
      %v1477 = vpop.f32.mrb[0].mxu0
      %v1478 = vadd.f32 %v1168, %v1477
      %v1479 = vpop.f32.mrb[0].mxu0
      %1480 = vmatprep.mubr.f32.mxu0 0.0
      %1481 = vmatmul.mubr.f32.gmra.mrb[0].mxu0 %v1261
      %v1482 = vpop.f32.mrb[0].mxu0
      %v1483 = vadd.f32 %v1168, %v1482
      %v1484 = vpop.f32.mrb[0].mxu0
      %1485 = vmatprep.mubr.f32.mxu0 0.0
      %1486 = vmatmul.mubr.f32.gmra.mrb[0].mxu0 %v1264
      %v1487 = vpop.f32.mrb[0].mxu0
      %v1488 = vadd.f32 %v1168, %v1487
      %v1489 = vpop.f32.mrb[0].mxu0
      %1490 = vdwg.mxu0
      %vm1491 = vcmask 64512
      %1492 = vst.msk [vmem:[%s397] sm:$0xff] %vm1491, %v1333
      %1493 = vst.msk [vmem:[%s397 + $0x8] sm:$0xff] %vm1491, %v1338
      %1494 = vst.msk [vmem:[%s397 + $0x10] sm:$0xff] %vm1491, %v1343
      %1495 = vst.msk [vmem:[%s397 + $0x18] sm:$0xff] %vm1491, %v1348
      %1496 = vst.msk [vmem:[%s397 + $0x20] sm:$0xff] %vm1491, %v1353
      %1497 = vst.msk [vmem:[%s397 + $0x28] sm:$0xff] %vm1491, %v1358
      %1498 = vst.msk [vmem:[%s397 + $0x30] sm:$0xff] %vm1491, %v1363
      %1499 = vst.msk [vmem:[%s397 + $0x38] sm:$0xff] %vm1491, %v1368
      %1500 = vst.msk [vmem:[%s397 + $0x40] sm:$0xff] %vm1491, %v1373
      %1501 = vst.msk [vmem:[%s397 + $0x48] sm:$0xff] %vm1491, %v1378
      %1502 = vst.msk [vmem:[%s397 + $0x50] sm:$0xff] %vm1491, %v1383
      %1503 = vst.msk [vmem:[%s397 + $0x58] sm:$0xff] %vm1491, %v1388
      %1504 = vst.msk [vmem:[%s397 + $0x60] sm:$0xff] %vm1491, %v1393
      %1505 = vst.msk [vmem:[%s397 + $0x68] sm:$0xff] %vm1491, %v1398
      %1506 = vst.msk [vmem:[%s397 + $0x70] sm:$0xff] %vm1491, %v1403
      %1507 = vst.msk [vmem:[%s397 + $0x78] sm:$0xff] %vm1491, %v1408
      %1508 = vst.msk [vmem:[%s397 + $0x80] sm:$0xff] %vm1491, %v1413
      %1509 = vst.msk [vmem:[%s397 + $0x88] sm:$0xff] %vm1491, %v1418
      %1510 = vst.msk [vmem:[%s397 + $0x90] sm:$0xff] %vm1491, %v1423
      %1511 = vst.msk [vmem:[%s397 + $0x98] sm:$0xff] %vm1491, %v1428
      %1512 = vst.msk [vmem:[%s397 + $0xa0] sm:$0xff] %vm1491, %v1433
      %1513 = vst.msk [vmem:[%s397 + $0xa8] sm:$0xff] %vm1491, %v1438
      %1514 = vst.msk [vmem:[%s397 + $0xb0] sm:$0xff] %vm1491, %v1443
      %1515 = vst.msk [vmem:[%s397 + $0xb8] sm:$0xff] %vm1491, %v1448
      %1516 = vst.msk [vmem:[%s397 + $0xc0] sm:$0xff] %vm1491, %v1453
      %1517 = vst.msk [vmem:[%s397 + $0xc8] sm:$0xff] %vm1491, %v1458
      %1518 = vst.msk [vmem:[%s397 + $0xd0] sm:$0xff] %vm1491, %v1463
      %1519 = vst.msk [vmem:[%s397 + $0xd8] sm:$0xff] %vm1491, %v1468
      %1520 = vst.msk [vmem:[%s397 + $0xe0] sm:$0xff] %vm1491, %v1473
      %1521 = vst.msk [vmem:[%s397 + $0xe8] sm:$0xff] %vm1491, %v1478
      %1522 = vst.msk [vmem:[%s397 + $0xf0] sm:$0xff] %vm1491, %v1483
      %1523 = vst.msk [vmem:[%s397 + $0xf8] sm:$0xff] %vm1491, %v1488
      %v1524 = vld [vmem:[%s8] sm:$0x1]
      %v1525 = vld [vmem:[%s385] sm:$0xff]
      %v1526 = vld [vmem:[%s385 + $0x8] sm:$0xff]
      %v1527 = vld [vmem:[%s385 + $0x10] sm:$0xff]
      %v1528 = vld [vmem:[%s385 + $0x18] sm:$0xff]
      %v1529 = vld [vmem:[%s385 + $0x20] sm:$0xff]
      %v1530 = vld [vmem:[%s385 + $0x28] sm:$0xff]
      %v1531 = vld [vmem:[%s385 + $0x30] sm:$0xff]
      %v1532 = vld [vmem:[%s385 + $0x38] sm:$0xff]
      %v1533 = vld [vmem:[%s385 + $0x40] sm:$0xff]
      %v1534 = vld [vmem:[%s385 + $0x48] sm:$0xff]
      %v1535 = vld [vmem:[%s385 + $0x50] sm:$0xff]
      %v1536 = vld [vmem:[%s385 + $0x58] sm:$0xff]
      %v1537 = vld [vmem:[%s385 + $0x60] sm:$0xff]
      %v1538 = vld [vmem:[%s385 + $0x68] sm:$0xff]
      %v1539 = vld [vmem:[%s385 + $0x70] sm:$0xff]
      %v1540 = vld [vmem:[%s385 + $0x78] sm:$0xff]
      %v1541 = vld [vmem:[%s385 + $0x80] sm:$0xff]
      %v1542 = vld [vmem:[%s385 + $0x88] sm:$0xff]
      %v1543 = vld [vmem:[%s385 + $0x90] sm:$0xff]
      %v1544 = vld [vmem:[%s385 + $0x98] sm:$0xff]
      %v1545 = vld [vmem:[%s385 + $0xa0] sm:$0xff]
      %v1546 = vld [vmem:[%s385 + $0xa8] sm:$0xff]
      %v1547 = vld [vmem:[%s385 + $0xb0] sm:$0xff]
      %v1548 = vld [vmem:[%s385 + $0xb8] sm:$0xff]
      %v1549 = vld [vmem:[%s385 + $0xc0] sm:$0xff]
      %v1550 = vld [vmem:[%s385 + $0xc8] sm:$0xff]
      %v1551 = vld [vmem:[%s385 + $0xd0] sm:$0xff]
      %v1552 = vld [vmem:[%s385 + $0xd8] sm:$0xff]
      %v1553 = vld [vmem:[%s385 + $0xe0] sm:$0xff]
      %v1554 = vld [vmem:[%s385 + $0xe8] sm:$0xff]
      %v1555 = vld [vmem:[%s385 + $0xf0] sm:$0xff]
      %v1556 = vld [vmem:[%s385 + $0xf8] sm:$0xff]
      %v1558 = vlaneseq
      %v1559 = vshrl.u32 %v1558, 7
      %v1560 = vsub.s32 0, %v1559
      %v1561 = vrot.slane %v1524, %v1560
      %v1563 = vmul.f32 %v1561, %v1525
      %v1564 = vmul.f32 %v1561, %v1526
      %v1565 = vmul.f32 %v1561, %v1527
      %v1566 = vmul.f32 %v1561, %v1528
      %v1567 = vmul.f32 %v1561, %v1529
      %v1568 = vmul.f32 %v1561, %v1530
      %v1569 = vmul.f32 %v1561, %v1531
      %v1570 = vmul.f32 %v1561, %v1532
      %v1571 = vmul.f32 %v1561, %v1533
      %v1572 = vmul.f32 %v1561, %v1534
      %v1573 = vmul.f32 %v1561, %v1535
      %v1574 = vmul.f32 %v1561, %v1536
      %v1575 = vmul.f32 %v1561, %v1537
      %v1576 = vmul.f32 %v1561, %v1538
      %v1577 = vmul.f32 %v1561, %v1539
      %v1578 = vmul.f32 %v1561, %v1540
      %v1579 = vmul.f32 %v1561, %v1541
      %v1580 = vmul.f32 %v1561, %v1542
      %v1581 = vmul.f32 %v1561, %v1543
      %v1582 = vmul.f32 %v1561, %v1544
      %v1583 = vmul.f32 %v1561, %v1545
      %v1584 = vmul.f32 %v1561, %v1546
      %v1585 = vmul.f32 %v1561, %v1547
      %v1586 = vmul.f32 %v1561, %v1548
      %v1587 = vmul.f32 %v1561, %v1549
      %v1588 = vmul.f32 %v1561, %v1550
      %v1589 = vmul.f32 %v1561, %v1551
      %v1590 = vmul.f32 %v1561, %v1552
      %v1591 = vmul.f32 %v1561, %v1553
      %v1592 = vmul.f32 %v1561, %v1554
      %v1593 = vmul.f32 %v1561, %v1555
      %v1594 = vmul.f32 %v1561, %v1556
      %v1595 = vadd.f32 %v1333, %v1563
      %v1596 = vadd.f32 %v1338, %v1564
      %v1597 = vadd.f32 %v1343, %v1565
      %v1598 = vadd.f32 %v1348, %v1566
      %v1599 = vadd.f32 %v1353, %v1567
      %v1600 = vadd.f32 %v1358, %v1568
      %v1601 = vadd.f32 %v1363, %v1569
      %v1602 = vadd.f32 %v1368, %v1570
      %v1603 = vadd.f32 %v1373, %v1571
      %v1604 = vadd.f32 %v1378, %v1572
      %v1605 = vadd.f32 %v1383, %v1573
      %v1606 = vadd.f32 %v1388, %v1574
      %v1607 = vadd.f32 %v1393, %v1575
      %v1608 = vadd.f32 %v1398, %v1576
      %v1609 = vadd.f32 %v1403, %v1577
      %v1610 = vadd.f32 %v1408, %v1578
      %v1611 = vadd.f32 %v1413, %v1579
      %v1612 = vadd.f32 %v1418, %v1580
      %v1613 = vadd.f32 %v1423, %v1581
      %v1614 = vadd.f32 %v1428, %v1582
      %v1615 = vadd.f32 %v1433, %v1583
      %v1616 = vadd.f32 %v1438, %v1584
      %v1617 = vadd.f32 %v1443, %v1585
      %v1618 = vadd.f32 %v1448, %v1586
      %v1619 = vadd.f32 %v1453, %v1587
      %v1620 = vadd.f32 %v1458, %v1588
      %v1621 = vadd.f32 %v1463, %v1589
      %v1622 = vadd.f32 %v1468, %v1590
      %v1623 = vadd.f32 %v1473, %v1591
      %v1624 = vadd.f32 %v1478, %v1592
      %v1625 = vadd.f32 %v1483, %v1593
      %v1626 = vadd.f32 %v1488, %v1594
      %1627 = vst.msk [vmem:[%s391] sm:$0xff] %vm1491, %v1595
      %1628 = vst.msk [vmem:[%s391 + $0x8] sm:$0xff] %vm1491, %v1596
      %1629 = vst.msk [vmem:[%s391 + $0x10] sm:$0xff] %vm1491, %v1597
      %1630 = vst.msk [vmem:[%s391 + $0x18] sm:$0xff] %vm1491, %v1598
      %1631 = vst.msk [vmem:[%s391 + $0x20] sm:$0xff] %vm1491, %v1599
      %1632 = vst.msk [vmem:[%s391 + $0x28] sm:$0xff] %vm1491, %v1600
      %1633 = vst.msk [vmem:[%s391 + $0x30] sm:$0xff] %vm1491, %v1601
      %1634 = vst.msk [vmem:[%s391 + $0x38] sm:$0xff] %vm1491, %v1602
      %1635 = vst.msk [vmem:[%s391 + $0x40] sm:$0xff] %vm1491, %v1603
      %1636 = vst.msk [vmem:[%s391 + $0x48] sm:$0xff] %vm1491, %v1604
      %1637 = vst.msk [vmem:[%s391 + $0x50] sm:$0xff] %vm1491, %v1605
      %1638 = vst.msk [vmem:[%s391 + $0x58] sm:$0xff] %vm1491, %v1606
      %1639 = vst.msk [vmem:[%s391 + $0x60] sm:$0xff] %vm1491, %v1607
      %1640 = vst.msk [vmem:[%s391 + $0x68] sm:$0xff] %vm1491, %v1608
      %1641 = vst.msk [vmem:[%s391 + $0x70] sm:$0xff] %vm1491, %v1609
      %1642 = vst.msk [vmem:[%s391 + $0x78] sm:$0xff] %vm1491, %v1610
      %1643 = vst.msk [vmem:[%s391 + $0x80] sm:$0xff] %vm1491, %v1611
      %1644 = vst.msk [vmem:[%s391 + $0x88] sm:$0xff] %vm1491, %v1612
      %1645 = vst.msk [vmem:[%s391 + $0x90] sm:$0xff] %vm1491, %v1613
      %1646 = vst.msk [vmem:[%s391 + $0x98] sm:$0xff] %vm1491, %v1614
      %1647 = vst.msk [vmem:[%s391 + $0xa0] sm:$0xff] %vm1491, %v1615
      %1648 = vst.msk [vmem:[%s391 + $0xa8] sm:$0xff] %vm1491, %v1616
      %1649 = vst.msk [vmem:[%s391 + $0xb0] sm:$0xff] %vm1491, %v1617
      %1650 = vst.msk [vmem:[%s391 + $0xb8] sm:$0xff] %vm1491, %v1618
      %1651 = vst.msk [vmem:[%s391 + $0xc0] sm:$0xff] %vm1491, %v1619
      %1652 = vst.msk [vmem:[%s391 + $0xc8] sm:$0xff] %vm1491, %v1620
      %1653 = vst.msk [vmem:[%s391 + $0xd0] sm:$0xff] %vm1491, %v1621
      %1654 = vst.msk [vmem:[%s391 + $0xd8] sm:$0xff] %vm1491, %v1622
      %1655 = vst.msk [vmem:[%s391 + $0xe0] sm:$0xff] %vm1491, %v1623
      %1656 = vst.msk [vmem:[%s391 + $0xe8] sm:$0xff] %vm1491, %v1624
      %1657 = vst.msk [vmem:[%s391 + $0xf0] sm:$0xff] %vm1491, %v1625
      %1658 = vst.msk [vmem:[%s391 + $0xf8] sm:$0xff] %vm1491, %v1626
      %s1659 = smul.u32 32, %s22
      %p1660 = scmp.lt.s32.totalorder %s1659, 63
      %s1661 = scalar_select %p1660, %s1659, 63
      %s1662 = smul.addr %s1661, 8
      %s1663 = scalar_lea.vmem %s9, %s1662
      %s1664 = smul.u32 32, %s22
      %p1665 = scmp.lt.s32.totalorder %s1664, 63
      %s1666 = scalar_select %p1665, %s1664, 63
      %s1667 = smul.addr %s1666, 8
      %s1668 = scalar_lea.vmem %s10, %s1667
      // Predicated region
      $region57: #{tpu_custom_call.1} parent=55 // pred_check
        %p1669 = pneg %p239
      $region58: #{tpu_custom_call.1} parent=55 // pred_check_branch
        %1671 = sbr.rel (%p1669) target = $region60
      $region59: #{tpu_custom_call.1} parent=55 // pred_region
        %s1672 = smul.u32 32, %s22
      $region60: #{tpu_custom_call.1} parent=55 // pred_fallthru
        _
      // Predicated region
      $region61: #{tpu_custom_call.1} parent=55 // pred_check
        %p1673 = pneg %p265
      $region62: #{tpu_custom_call.1} parent=55 // pred_check_branch
        %1675 = sbr.rel (%p1673) target = $region64
      $region63: #{tpu_custom_call.1} parent=55 // pred_region
        %s1676 = smul.u32 32, %s22
      $region64: #{tpu_custom_call.1} parent=55 // pred_fallthru
        _
    $region56: #{tpu_custom_call.1} parent=5 // pred_fallthru
      _
    %p1677 = scmp.le.s32.totalorder 2, %s17
    // Predicated region
    $region65: #{tpu_custom_call.1} parent=5 // pred_check
      %p1678 = pneg %p1677
    $region66: #{tpu_custom_call.1} parent=5 // pred_check_branch
      %1680 = sbr.rel (%p1678) target = $region68
    $region67: #{tpu_custom_call.1} parent=5 // pred_region
      %s1681 = ssub.s32 %s17, 2
      // Predicated region
      $region69: #{tpu_custom_call.1} parent=67 // pred_check
        %p1682 = pneg %p245
      $region70: #{tpu_custom_call.1} parent=67 // pred_check_branch
        %1684 = sbr.rel (%p1682) target = $region72
      $region71: #{tpu_custom_call.1} parent=67 // pred_region
        %s1685 = smul.u32 32, %s23
        %p1686 = scmp.lt.s32.totalorder %s1685, 63
        %s1687 = scalar_select %p1686, %s1685, 63
        %s1688 = smul.addr %s1687, 8
        %s1689 = scalar_lea.vmem %s9, %s1688
      $region72: #{tpu_custom_call.1} parent=67 // pred_fallthru
        _
      // Predicated region
      $region73: #{tpu_custom_call.1} parent=67 // pred_check
        %p1690 = pneg %p271
      $region74: #{tpu_custom_call.1} parent=67 // pred_check_branch
        %1692 = sbr.rel (%p1690) target = $region76
      $region75: #{tpu_custom_call.1} parent=67 // pred_region
        %s1693 = smul.u32 32, %s23
        %p1694 = scmp.lt.s32.totalorder %s1693, 63
        %s1695 = scalar_select %p1694, %s1693, 63
        %s1696 = smul.addr %s1695, 8
        %s1697 = scalar_lea.vmem %s10, %s1696
      $region76: #{tpu_custom_call.1} parent=67 // pred_fallthru
        _
    $region68: #{tpu_custom_call.1} parent=5 // pred_fallthru
      _
  $region6: #{tpu_custom_call.1} parent=0 // loop_footer
    %s21 = sadd.s32 1, %s17
  $region7: #{tpu_custom_call.1} parent=0 // loop_footer_branch
    %16 = sbr.rel target = $region3
  $region8: #{tpu_custom_call.1} parent=0 // loop_exit
    _

</llo_original>
